<compile_context>
chip_gen: v5e
topology: v5e:2x2
jax: 0.10.0
libtpu: 0.0.40
codegen_flags: <defaults>
</compile_context>

<pallas_src>
import math

import jax
import jax.numpy as jnp
from jax import lax
from jax.experimental import pallas as pl
from jax.experimental.pallas import tpu as pltpu


# ----------------------------------------------------------------------------
# Kernel
# ----------------------------------------------------------------------------
def _ha_kernel(x_ref, w_ref, b_ref, out_ref, p1_ref):
    Bt, C, H, Wt = x_ref.shape
    N = Bt * H
    j = pl.program_id(1)                       # W-chunk index ("arbitrary")
    n_w = pl.num_programs(1)

    # ---- width pooling: accumulate sum_W(x) into the persistent scratch ----
    @pl.when(j == 0)
    def _():
        p1_ref[...] = jnp.zeros_like(p1_ref)

    # One VMEM write per batch row at lane offset b*H (O(Bt), no lane concats).
    # NOTE: if the lane reduce ever saturates the XLU, pre-add W in 128-lane
    # chunks on the VPU before a single cross-lane reduce.
    for b in range(Bt):                        # Bt is a small static int
        p1_ref[:, b * H:(b + 1) * H] += jnp.sum(
            x_ref[b], axis=-1, dtype=jnp.float32)

    # ---- pooled conv chain + lane-dense store once all W chunks are in -----
    @pl.when(j == n_w - 1)
    def _():
        p1 = p1_ref[...] * (1.0 / (Wt * n_w))           # mean over the full W

        # batch-boundary masks from a single iota (no per-batch concats)
        hmod = lax.broadcasted_iota(jnp.int32, (1, N), 1) % H
        m_lo = (hmod != 0).astype(jnp.float32)          # the h-1 tap exists
        m_hi = (hmod != H - 1).astype(jnp.float32)      # the h+1 tap exists

        def conv(idx, pieces):
            # nn.Conv2d(kernel=(3,1), stride=1, padding=(1,0), bias=True) on
            # the width-pooled map.  `pieces` are channel blocks of the input
            # (consecutive column blocks of the packed weight); each tap is
            # one MXU matmul and the h+-1 taps are realized by rolling the
            # *outputs* one lane (XLU) + masking the batch edges (any
            # wrap-around lands exactly on masked lanes).
            taps = []
            for t in range(3):
                acc, off = None, 0
                for arr in pieces:
                    ci = arr.shape[0]
                    y = jnp.dot(w_ref[idx, t, :, off:off + ci], arr,
                                preferred_element_type=jnp.float32)
                    acc = y if acc is None else acc + y
                    off += ci
                taps.append(acc)
            y = (pltpu.roll(taps[0], shift=1, axis=1) * m_lo
                 + taps[1]
                 + pltpu.roll(taps[2], shift=N - 1, axis=1) * m_hi)
            return y + b_ref[idx]                        # (C, 1) bias, VPU add

        def fc(idx, pieces):                   # Conv -> ReLU -> Conv -> ReLU
            y = jnp.maximum(conv(idx, pieces), 0.0)
            return jnp.maximum(conv(idx + 1, [y]), 0.0)

        hy1 = fc(0, [p1])
        p2 = hy1 * p1                          # == mean_W(x_1)
        hy2 = fc(2, [p2])
        p3 = hy2 * p2                          # == mean_W(x_2)
        hy3 = fc(4, [p3])
        hy4 = fc(6, [p2, p3, hy3 * p3])        # fc4 on mean_W(cat(x1,x2,x3))

        out_ref[...] = hy4.astype(out_ref.dtype)         # lane-dense store


# ----------------------------------------------------------------------------
# Parameter packing
# ----------------------------------------------------------------------------
def _pack_params(params, C):
    """Pack the 8 (Co, Ci, 3, 1) conv weights into a single (8, 3, C, 3C) f32
    buffer (tap-major, channel columns zero-padded to the widest conv, i.e.
    fc4's Ci = 3C) plus an (8, C, 1) f32 bias buffer."""
    cmax = 3 * C
    wrows, brows = [], []
    for (w, b) in params:
        ci = w.shape[1]
        taps = [jnp.pad(w[:, :, t, 0].astype(jnp.float32),
                        ((0, 0), (0, cmax - ci))) for t in range(3)]
        wrows.append(jnp.stack(taps, axis=0))            # (3, C, cmax)
        brows.append(b.astype(jnp.float32)[:, None])     # (C, 1)
    return jnp.stack(wrows, axis=0), jnp.stack(brows, axis=0)


# ----------------------------------------------------------------------------
# Generation-aware tiling plan
# ----------------------------------------------------------------------------
def _tpu_vmem_bytes():
    """Per-core VMEM capacity; conservative fallback if the query fails."""
    try:
        info = pltpu.get_tpu_info()
        v = getattr(info, "vmem_capacity_bytes", None)
        if v:
            return int(v)
    except Exception:
        pass
    return 64 << 20                       # assume the smallest (v7x per-core)


def _plan_tiling(B, C, H, W, itemsize):
    """Pick (batch_tile, w_tile, padded_batch, vmem_limit) such that:
      * the (C, bt*H) output block is always lane-dense (bt*H % 128 == 0),
      * double-buffered x / out blocks plus pooled f32 intermediates fit a
        generation-aware VMEM budget,
      * W is tiled (p1-accumulator grid axis) when one W slab would not fit,
      * on 2-TensorCore chips (v7x) the parallel batch axis keeps >= 2 steps.
    """
    vmem = _tpu_vmem_bytes()
    vmem_limit = max(32 << 20, min(int(vmem * 0.8), 100 << 20))
    budget = int(vmem_limit * 0.7)
    two_cores = vmem <= (96 << 20)        # v7x-like: 64 MiB per TC, 2 TCs/chip

    g = 128 // math.gcd(H, 128)           # bt granularity: (bt*H) % 128 == 0
    b_ceil = -(-B // g) * g

    def per_batch_bytes(wt):              # VMEM cost of one batch row
        return (2 * C * H * wt * itemsize      # x block (double-buffered)
                + 2 * C * H * itemsize         # out block (double-buffered)
                + 14 * C * H * 4)              # pooled f32 intermediates

    # W tiles to try: the full width first, then 128-multiples that divide W.
    wt_opts = [W] + [w for w in range(W - (W % 128), 0, -128)
                     if w < W and W % w == 0]

    bt = wt = None
    for wt_try in wt_opts:
        cap = budget // per_batch_bytes(wt_try)
        if cap >= g:
            bt, wt = min(b_ceil, (cap // g) * g), wt_try
            break
    if bt is None:
        # TODO(synk): even the minimal lane-dense block busts the budget; keep
        # it anyway (Mosaic may spill) rather than emit an illegal BlockSpec.
        bt, wt = g, wt_opts[-1]

    bt = min(bt, 128)                     # bound the unrolled pooling loop
    if two_cores and b_ceil // bt < 2 and b_ceil >= 2 * g:
        bt = max(g, (b_ceil // 2) // g * g)    # give both TensorCores work

    b_pad = -(-B // bt) * bt
    return bt, wt, b_pad, vmem_limit


# ----------------------------------------------------------------------------
# Wrapper
# ----------------------------------------------------------------------------
def ha_layer(x, params):
    """params: list of 8 (weight (Co,Ci,3,1), bias (Co,)) tuples in order
    fc1.conv0, fc1.conv1, fc2.conv0, fc2.conv1, fc3.conv0, fc3.conv1,
    fc4.conv0, fc4.conv1.  Returns (B, C, H, 1) like the PyTorch module."""
    B, C, H, W = x.shape
    wpack, bpack = _pack_params(params, C)
    bt, wt, b_pad, vmem_limit = _plan_tiling(B, C, H, W, x.dtype.itemsize)
    if b_pad != B:                        # pad batch for lane-dense out tiles
        x = jnp.pad(x, ((0, b_pad - B), (0, 0), (0, 0), (0, 0)))

    out2d = pl.pallas_call(
        _ha_kernel,
        out_shape=jax.ShapeDtypeStruct((C, b_pad * H), x.dtype),
        grid=(b_pad // bt, W // wt),
        in_specs=[
            pl.BlockSpec((bt, C, H, wt), lambda i, j: (i, 0, 0, j)),
            pl.BlockSpec(wpack.shape, lambda i, j: (0, 0, 0, 0)),
            pl.BlockSpec(bpack.shape, lambda i, j: (0, 0, 0)),
        ],
        out_specs=pl.BlockSpec((C, bt * H), lambda i, j: (0, i)),
        scratch_shapes=[pltpu.VMEM((C, bt * H), jnp.float32)],
        compiler_params=pltpu.CompilerParams(
            dimension_semantics=("parallel", "arbitrary"),
            vmem_limit_bytes=int(vmem_limit)),
    )(x, wpack, bpack)

    # (C, Bp*H) -> (B, C, H, 1): tiny layout plumbing in the wrapper keeps the
    # kernel's store lane-dense; padded batches are sliced away here.
    return jnp.transpose(out2d.reshape(C, b_pad, H), (1, 0, 2))[:B, :, :, None]


# ----------------------------------------------------------------------------
# Pure-JAX reference mirroring the PyTorch forward (NCHW, lax.conv)
# ----------------------------------------------------------------------------
def _ref_forward(x, params):
    def conv(inp, w, b):
        y = lax.conv_general_dilated(
            inp, w, window_strides=(1, 1), padding=((1, 1), (0, 0)),
            dimension_numbers=("NCHW", "OIHW", "NCHW"))
        return y + b[None, :, None, None]

    def fc(inp, pa, pb):
        y = jax.nn.relu(conv(inp, *pa))
        return jax.nn.relu(conv(y, *pb))

    pool = lambda t: jnp.mean(t, axis=3, keepdims=True)  # AdaptiveAvgPool2d((H,1))
    hy1 = fc(pool(x), params[0], params[1]); x1 = hy1 * x
    hy2 = fc(pool(x1), params[2], params[3]); x2 = hy2 * x1
    hy3 = fc(pool(x2), params[4], params[5]); x3 = hy3 * x2
    xx = jnp.concatenate([x1, x2, x3], axis=1)
    hy4 = fc(pool(xx), params[6], params[7])
    return hy4


if __name__ == "__main__":
    B, C, H, W = 2, 4, 16, 16
    key = jax.random.PRNGKey(0)
    keys = jax.random.split(key, 17)

    x = jax.random.normal(keys[0], (B, C, H, W), jnp.float32)

    def make_conv(kw, kb, co, ci):
        w = 0.2 * jax.random.normal(kw, (co, ci, 3, 1), jnp.float32)
        b = 0.05 * jax.random.normal(kb, (co,), jnp.float32)
        return (w, b)

    conv_shapes = [(C, C)] * 6 + [(C, 3 * C), (C, C)]
    params = [make_conv(keys[1 + 2 * i], keys[2 + 2 * i], co, ci)
              for i, (co, ci) in enumerate(conv_shapes)]

    out = jax.block_until_ready(ha_layer(x, params))
    ref = _ref_forward(x, params)

    assert out.shape == (B, C, H, 1), out.shape
    assert jnp.allclose(out, ref, atol=2e-4, rtol=2e-4), \
        float(jnp.max(jnp.abs(out - ref)))

    print("KERNEL_OK")
</pallas_src>

<mosaic_0001>
module attributes {stable_mosaic.version = 11 : i64} {
  func.func @_ha_kernel(%arg0: i32, %arg1: i32, %arg2: memref<8x4x16x16xf32, #tpu.memory_space<vmem>>, %arg3: memref<8x3x4x12xf32, #tpu.memory_space<vmem>>, %arg4: memref<8x4x1xf32, #tpu.memory_space<vmem>>, %arg5: memref<4x128xf32, #tpu.memory_space<vmem>>, %arg6: memref<4x128xf32, #tpu.memory_space<vmem>>) attributes {dimension_semantics = [#tpu.dimension_semantics<parallel>, #tpu.dimension_semantics<arbitrary>], iteration_bounds = array<i64: 1, 1>, scalar_prefetch = 0 : i64, scratch_operands = 1 : i64, tpu.core_type = #tpu.core_type<tc>, window_params = [{transform_indices = @transform_0, window_bounds = array<i64: 8, 4, 16, 16>}, {pipeline_mode = #tpu.pipeline_mode<synchronous>, transform_indices = @transform_1, window_bounds = array<i64: 8, 3, 4, 12>}, {pipeline_mode = #tpu.pipeline_mode<synchronous>, transform_indices = @transform_2, window_bounds = array<i64: 8, 4, 1>}, {transform_indices = @transform_3, window_bounds = array<i64: 4, 128>}]} {
    %c0_i32 = arith.constant 0 : i32
    %0 = arith.cmpi eq, %arg1, %c0_i32 : i32
    %1 = arith.extui %0 : i1 to i32
    %c0_i32_0 = arith.constant 0 : i32
    %2 = arith.cmpi ne, %1, %c0_i32_0 : i32
    scf.if %2 {
      %cst_59 = arith.constant 0.000000e+00 : f32
      %54 = vector.broadcast %cst_59 : f32 to vector<4x128xf32>
      %c0_60 = arith.constant 0 : index
      %c0_61 = arith.constant 0 : index
      %55 = vector.load %arg6[%c0_60, %c0_61] : memref<4x128xf32, #tpu.memory_space<vmem>>, vector<4x128xf32>
      tpu.vector_store %arg6[%c0_60, %c0_61], %54 {strides = array<i32>} : memref<4x128xf32, #tpu.memory_space<vmem>>, vector<4x128xf32>,
    } else {
    }
    %c0 = arith.constant 0 : index
    %c0_1 = arith.constant 0 : index
    %3 = vector.load %arg6[%c0, %c0_1] : memref<4x128xf32, #tpu.memory_space<vmem>>, vector<4x16xf32>
    %c0_2 = arith.constant 0 : index
    %c0_3 = arith.constant 0 : index
    %c0_4 = arith.constant 0 : index
    %c0_5 = arith.constant 0 : index
    %4 = vector.load %arg2[%c0_2, %c0_3, %c0_4, %c0_5] : memref<8x4x16x16xf32, #tpu.memory_space<vmem>>, vector<1x4x16x16xf32>
    %5 = vector.shape_cast %4 : vector<1x4x16x16xf32> to vector<4x16x16xf32>
    %cst = arith.constant dense<0.000000e+00> : vector<4x16xf32>
    %6 = vector.multi_reduction <add>, %5, %cst [2] : vector<4x16x16xf32> to vector<4x16xf32>
    %7 = arith.addf %3, %6 : vector<4x16xf32>
    %c0_6 = arith.constant 0 : index
    %c0_7 = arith.constant 0 : index
    %8 = vector.load %arg6[%c0_6, %c0_7] : memref<4x128xf32, #tpu.memory_space<vmem>>, vector<4x16xf32>
    tpu.vector_store %arg6[%c0_6, %c0_7], %7 {strides = array<i32>} : memref<4x128xf32, #tpu.memory_space<vmem>>, vector<4x16xf32>,
    %c0_8 = arith.constant 0 : index
    %c16 = arith.constant 16 : index
    %9 = vector.load %arg6[%c0_8, %c16] : memref<4x128xf32, #tpu.memory_space<vmem>>, vector<4x16xf32>
    %c1 = arith.constant 1 : index
    %c0_9 = arith.constant 0 : index
    %c0_10 = arith.constant 0 : index
    %c0_11 = arith.constant 0 : index
    %10 = vector.load %arg2[%c1, %c0_9, %c0_10, %c0_11] : memref<8x4x16x16xf32, #tpu.memory_space<vmem>>, vector<1x4x16x16xf32>
    %11 = vector.shape_cast %10 : vector<1x4x16x16xf32> to vector<4x16x16xf32>
    %cst_12 = arith.constant dense<0.000000e+00> : vector<4x16xf32>
    %12 = vector.multi_reduction <add>, %11, %cst_12 [2] : vector<4x16x16xf32> to vector<4x16xf32>
    %13 = arith.addf %9, %12 : vector<4x16xf32>
    %c0_13 = arith.constant 0 : index
    %c16_14 = arith.constant 16 : index
    %14 = vector.load %arg6[%c0_13, %c16_14] : memref<4x128xf32, #tpu.memory_space<vmem>>, vector<4x16xf32>
    tpu.vector_store %arg6[%c0_13, %c16_14], %13 {strides = array<i32>} : memref<4x128xf32, #tpu.memory_space<vmem>>, vector<4x16xf32>,
    %c0_15 = arith.constant 0 : index
    %c32 = arith.constant 32 : index
    %15 = vector.load %arg6[%c0_15, %c32] : memref<4x128xf32, #tpu.memory_space<vmem>>, vector<4x16xf32>
    %c2 = arith.constant 2 : index
    %c0_16 = arith.constant 0 : index
    %c0_17 = arith.constant 0 : index
    %c0_18 = arith.constant 0 : index
    %16 = vector.load %arg2[%c2, %c0_16, %c0_17, %c0_18] : memref<8x4x16x16xf32, #tpu.memory_space<vmem>>, vector<1x4x16x16xf32>
    %17 = vector.shape_cast %16 : vector<1x4x16x16xf32> to vector<4x16x16xf32>
    %cst_19 = arith.constant dense<0.000000e+00> : vector<4x16xf32>
    %18 = vector.multi_reduction <add>, %17, %cst_19 [2] : vector<4x16x16xf32> to vector<4x16xf32>
    %19 = arith.addf %15, %18 : vector<4x16xf32>
    %c0_20 = arith.constant 0 : index
    %c32_21 = arith.constant 32 : index
    %20 = vector.load %arg6[%c0_20, %c32_21] : memref<4x128xf32, #tpu.memory_space<vmem>>, vector<4x16xf32>
    tpu.vector_store %arg6[%c0_20, %c32_21], %19 {strides = array<i32>} : memref<4x128xf32, #tpu.memory_space<vmem>>, vector<4x16xf32>,
    %c0_22 = arith.constant 0 : index
    %c48 = arith.constant 48 : index
    %21 = vector.load %arg6[%c0_22, %c48] : memref<4x128xf32, #tpu.memory_space<vmem>>, vector<4x16xf32>
    %c3 = arith.constant 3 : index
    %c0_23 = arith.constant 0 : index
    %c0_24 = arith.constant 0 : index
    %c0_25 = arith.constant 0 : index
    %22 = vector.load %arg2[%c3, %c0_23, %c0_24, %c0_25] : memref<8x4x16x16xf32, #tpu.memory_space<vmem>>, vector<1x4x16x16xf32>
    %23 = vector.shape_cast %22 : vector<1x4x16x16xf32> to vector<4x16x16xf32>
    %cst_26 = arith.constant dense<0.000000e+00> : vector<4x16xf32>
    %24 = vector.multi_reduction <add>, %23, %cst_26 [2] : vector<4x16x16xf32> to vector<4x16xf32>
    %25 = arith.addf %21, %24 : vector<4x16xf32>
    %c0_27 = arith.constant 0 : index
    %c48_28 = arith.constant 48 : index
    %26 = vector.load %arg6[%c0_27, %c48_28] : memref<4x128xf32, #tpu.memory_space<vmem>>, vector<4x16xf32>
    tpu.vector_store %arg6[%c0_27, %c48_28], %25 {strides = array<i32>} : memref<4x128xf32, #tpu.memory_space<vmem>>, vector<4x16xf32>,
    %c0_29 = arith.constant 0 : index
    %c64 = arith.constant 64 : index
    %27 = vector.load %arg6[%c0_29, %c64] : memref<4x128xf32, #tpu.memory_space<vmem>>, vector<4x16xf32>
    %c4 = arith.constant 4 : index
    %c0_30 = arith.constant 0 : index
    %c0_31 = arith.constant 0 : index
    %c0_32 = arith.constant 0 : index
    %28 = vector.load %arg2[%c4, %c0_30, %c0_31, %c0_32] : memref<8x4x16x16xf32, #tpu.memory_space<vmem>>, vector<1x4x16x16xf32>
    %29 = vector.shape_cast %28 : vector<1x4x16x16xf32> to vector<4x16x16xf32>
    %cst_33 = arith.constant dense<0.000000e+00> : vector<4x16xf32>
    %30 = vector.multi_reduction <add>, %29, %cst_33 [2] : vector<4x16x16xf32> to vector<4x16xf32>
    %31 = arith.addf %27, %30 : vector<4x16xf32>
    %c0_34 = arith.constant 0 : index
    %c64_35 = arith.constant 64 : index
    %32 = vector.load %arg6[%c0_34, %c64_35] : memref<4x128xf32, #tpu.memory_space<vmem>>, vector<4x16xf32>
    tpu.vector_store %arg6[%c0_34, %c64_35], %31 {strides = array<i32>} : memref<4x128xf32, #tpu.memory_space<vmem>>, vector<4x16xf32>,
    %c0_36 = arith.constant 0 : index
    %c80 = arith.constant 80 : index
    %33 = vector.load %arg6[%c0_36, %c80] : memref<4x128xf32, #tpu.memory_space<vmem>>, vector<4x16xf32>
    %c5 = arith.constant 5 : index
    %c0_37 = arith.constant 0 : index
    %c0_38 = arith.constant 0 : index
    %c0_39 = arith.constant 0 : index
    %34 = vector.load %arg2[%c5, %c0_37, %c0_38, %c0_39] : memref<8x4x16x16xf32, #tpu.memory_space<vmem>>, vector<1x4x16x16xf32>
    %35 = vector.shape_cast %34 : vector<1x4x16x16xf32> to vector<4x16x16xf32>
    %cst_40 = arith.constant dense<0.000000e+00> : vector<4x16xf32>
    %36 = vector.multi_reduction <add>, %35, %cst_40 [2] : vector<4x16x16xf32> to vector<4x16xf32>
    %37 = arith.addf %33, %36 : vector<4x16xf32>
    %c0_41 = arith.constant 0 : index
    %c80_42 = arith.constant 80 : index
    %38 = vector.load %arg6[%c0_41, %c80_42] : memref<4x128xf32, #tpu.memory_space<vmem>>, vector<4x16xf32>
    tpu.vector_store %arg6[%c0_41, %c80_42], %37 {strides = array<i32>} : memref<4x128xf32, #tpu.memory_space<vmem>>, vector<4x16xf32>,
    %c0_43 = arith.constant 0 : index
    %c96 = arith.constant 96 : index
    %39 = vector.load %arg6[%c0_43, %c96] : memref<4x128xf32, #tpu.memory_space<vmem>>, vector<4x16xf32>
    %c6 = arith.constant 6 : index
    %c0_44 = arith.constant 0 : index
    %c0_45 = arith.constant 0 : index
    %c0_46 = arith.constant 0 : index
    %40 = vector.load %arg2[%c6, %c0_44, %c0_45, %c0_46] : memref<8x4x16x16xf32, #tpu.memory_space<vmem>>, vector<1x4x16x16xf32>
    %41 = vector.shape_cast %40 : vector<1x4x16x16xf32> to vector<4x16x16xf32>
    %cst_47 = arith.constant dense<0.000000e+00> : vector<4x16xf32>
    %42 = vector.multi_reduction <add>, %41, %cst_47 [2] : vector<4x16x16xf32> to vector<4x16xf32>
    %43 = arith.addf %39, %42 : vector<4x16xf32>
    %c0_48 = arith.constant 0 : index
    %c96_49 = arith.constant 96 : index
    %44 = vector.load %arg6[%c0_48, %c96_49] : memref<4x128xf32, #tpu.memory_space<vmem>>, vector<4x16xf32>
    tpu.vector_store %arg6[%c0_48, %c96_49], %43 {strides = array<i32>} : memref<4x128xf32, #tpu.memory_space<vmem>>, vector<4x16xf32>,
    %c0_50 = arith.constant 0 : index
    %c112 = arith.constant 112 : index
    %45 = vector.load %arg6[%c0_50, %c112] : memref<4x128xf32, #tpu.memory_space<vmem>>, vector<4x16xf32>
    %c7 = arith.constant 7 : index
    %c0_51 = arith.constant 0 : index
    %c0_52 = arith.constant 0 : index
    %c0_53 = arith.constant 0 : index
    %46 = vector.load %arg2[%c7, %c0_51, %c0_52, %c0_53] : memref<8x4x16x16xf32, #tpu.memory_space<vmem>>, vector<1x4x16x16xf32>
    %47 = vector.shape_cast %46 : vector<1x4x16x16xf32> to vector<4x16x16xf32>
    %cst_54 = arith.constant dense<0.000000e+00> : vector<4x16xf32>
    %48 = vector.multi_reduction <add>, %47, %cst_54 [2] : vector<4x16x16xf32> to vector<4x16xf32>
    %49 = arith.addf %45, %48 : vector<4x16xf32>
    %c0_55 = arith.constant 0 : index
    %c112_56 = arith.constant 112 : index
    %50 = vector.load %arg6[%c0_55, %c112_56] : memref<4x128xf32, #tpu.memory_space<vmem>>, vector<4x16xf32>
    tpu.vector_store %arg6[%c0_55, %c112_56], %49 {strides = array<i32>} : memref<4x128xf32, #tpu.memory_space<vmem>>, vector<4x16xf32>,
    %c0_i32_57 = arith.constant 0 : i32
    %51 = arith.cmpi eq, %arg1, %c0_i32_57 : i32
    %52 = arith.extui %51 : i1 to i32
    %c0_i32_58 = arith.constant 0 : i32
    %53 = arith.cmpi ne, %52, %c0_i32_58 : i32
    scf.if %53 {
      %c0_59 = arith.constant 0 : index
      %c0_60 = arith.constant 0 : index
      %54 = vector.load %arg6[%c0_59, %c0_60] : memref<4x128xf32, #tpu.memory_space<vmem>>, vector<4x128xf32>
      %cst_61 = arith.constant 6.250000e-02 : f32
      %55 = vector.broadcast %cst_61 : f32 to vector<4x128xf32>
      %56 = arith.mulf %54, %55 : vector<4x128xf32>
      %57 = tpu.iota {dimensions = array<i32: 1>} : vector<1x128xi32>
      %c16_i32 = arith.constant 16 : i32
      %c0_i32_62 = arith.constant 0 : i32
      %58 = arith.cmpi eq, %c16_i32, %c0_i32_62 : i32
      %c1_i32 = arith.constant 1 : i32
      %59 = arith.select %58, %c1_i32, %c16_i32 : i32
      %60 = vector.broadcast %59 : i32 to vector<1x128xi32>
      %61 = arith.remsi %57, %60 : vector<1x128xi32>
      %c0_i32_63 = arith.constant 0 : i32
      %62 = vector.broadcast %c0_i32_63 : i32 to vector<1x128xi32>
      %63 = arith.cmpi ne, %61, %62 : vector<1x128xi32>
      %c0_i32_64 = arith.constant 0 : i32
      %64 = vector.broadcast %c0_i32_64 : i32 to vector<1x128xi32>
      %65 = arith.cmpi slt, %61, %64 : vector<1x128xi32>
      %c0_i32_65 = arith.constant 0 : i32
      %66 = arith.cmpi slt, %59, %c0_i32_65 : i32
      %67 = vector.broadcast %66 : i1 to vector<1x128xi1>
      %68 = vector.broadcast %67 : vector<1x128xi1> to vector<1x128xi1>
      %69 = arith.xori %65, %68 : vector<1x128xi1>
      %70 = arith.andi %69, %63 : vector<1x128xi1>
      %71 = vector.broadcast %59 : i32 to vector<1x128xi32>
      %72 = arith.addi %61, %71 : vector<1x128xi32>
      %73 = arith.select %70, %72, %61 : vector<1x128xi1>, vector<1x128xi32>
      %c0_i32_66 = arith.constant 0 : i32
      %74 = vector.broadcast %c0_i32_66 : i32 to vector<1x128xi32>
      %75 = arith.cmpi ne, %73, %74 : vector<1x128xi32>
      %76 = arith.extui %75 : vector<1x128xi1> to vector<1x128xi32>
      %77 = arith.sitofp %76 : vector<1x128xi32> to vector<1x128xf32>
      %c15_i32 = arith.constant 15 : i32
      %78 = vector.broadcast %c15_i32 : i32 to vector<1x128xi32>
      %79 = arith.cmpi ne, %73, %78 : vector<1x128xi32>
      %80 = arith.extui %79 : vector<1x128xi1> to vector<1x128xi32>
      %81 = arith.sitofp %80 : vector<1x128xi32> to vector<1x128xf32>
      %c0_67 = arith.constant 0 : index
      %c0_68 = arith.constant 0 : index
      %c0_69 = arith.constant 0 : index
      %c0_70 = arith.constant 0 : index
      %82 = vector.load %arg3[%c0_67, %c0_68, %c0_69, %c0_70] : memref<8x3x4x12xf32, #tpu.memory_space<vmem>>, vector<1x1x4x4xf32>
      %83 = vector.shape_cast %82 : vector<1x1x4x4xf32> to vector<4x4xf32>
      %cst_71 = arith.constant dense<0.000000e+00> : vector<4x128xf32>
      %84 = tpu.matmul %83, %56, %cst_71 {dimension_numbers = #tpu.dot_dimension_numbers<[1], [0], [0], [1], [0, 0, 1, 1], [], []>} : vector<4x4xf32>, vector<4x128xf32>, vector<4x128xf32> -> vector<4x128xf32>
      %c0_72 = arith.constant 0 : index
      %c1_73 = arith.constant 1 : index
      %c0_74 = arith.constant 0 : index
      %c0_75 = arith.constant 0 : index
      %85 = vector.load %arg3[%c0_72, %c1_73, %c0_74, %c0_75] : memref<8x3x4x12xf32, #tpu.memory_space<vmem>>, vector<1x1x4x4xf32>
      %86 = vector.shape_cast %85 : vector<1x1x4x4xf32> to vector<4x4xf32>
      %cst_76 = arith.constant dense<0.000000e+00> : vector<4x128xf32>
      %87 = tpu.matmul %86, %56, %cst_76 {dimension_numbers = #tpu.dot_dimension_numbers<[1], [0], [0], [1], [0, 0, 1, 1], [], []>} : vector<4x4xf32>, vector<4x128xf32>, vector<4x128xf32> -> vector<4x128xf32>
      %c0_77 = arith.constant 0 : index
      %c2_78 = arith.constant 2 : index
      %c0_79 = arith.constant 0 : index
      %c0_80 = arith.constant 0 : index
      %88 = vector.load %arg3[%c0_77, %c2_78, %c0_79, %c0_80] : memref<8x3x4x12xf32, #tpu.memory_space<vmem>>, vector<1x1x4x4xf32>
      %89 = vector.shape_cast %88 : vector<1x1x4x4xf32> to vector<4x4xf32>
      %cst_81 = arith.constant dense<0.000000e+00> : vector<4x128xf32>
      %90 = tpu.matmul %89, %56, %cst_81 {dimension_numbers = #tpu.dot_dimension_numbers<[1], [0], [0], [1], [0, 0, 1, 1], [], []>} : vector<4x4xf32>, vector<4x128xf32>, vector<4x128xf32> -> vector<4x128xf32>
      %c1_i32_82 = arith.constant 1 : i32
      %91 = tpu.dynamic_rotate %84 by %c1_i32_82 dim 1 : vector<4x128xf32>, i32 -> vector<4x128xf32>
      %92 = vector.broadcast %77 : vector<1x128xf32> to vector<4x128xf32>
      %93 = arith.mulf %91, %92 : vector<4x128xf32>
      %94 = arith.addf %93, %87 : vector<4x128xf32>
      %c127_i32 = arith.constant 127 : i32
      %95 = tpu.dynamic_rotate %90 by %c127_i32 dim 1 : vector<4x128xf32>, i32 -> vector<4x128xf32>
      %96 = vector.broadcast %81 : vector<1x128xf32> to vector<4x128xf32>
      %97 = arith.mulf %95, %96 : vector<4x128xf32>
      %98 = arith.addf %94, %97 : vector<4x128xf32>
      %c0_83 = arith.constant 0 : index
      %c0_84 = arith.constant 0 : index
      %c0_85 = arith.constant 0 : index
      %99 = vector.load %arg4[%c0_83, %c0_84, %c0_85] : memref<8x4x1xf32, #tpu.memory_space<vmem>>, vector<1x4x1xf32>
      %100 = vector.shape_cast %99 : vector<1x4x1xf32> to vector<4x1xf32>
      %101 = vector.broadcast %100 : vector<4x1xf32> to vector<4x128xf32>
      %102 = arith.addf %98, %101 : vector<4x128xf32>
      %cst_86 = arith.constant 0.000000e+00 : f32
      %103 = vector.broadcast %cst_86 : f32 to vector<4x128xf32>
      %104 = arith.maximumf %102, %103 : vector<4x128xf32>
      %c1_87 = arith.constant 1 : index
      %c0_88 = arith.constant 0 : index
      %c0_89 = arith.constant 0 : index
      %c0_90 = arith.constant 0 : index
      %105 = vector.load %arg3[%c1_87, %c0_88, %c0_89, %c0_90] : memref<8x3x4x12xf32, #tpu.memory_space<vmem>>, vector<1x1x4x4xf32>
      %106 = vector.shape_cast %105 : vector<1x1x4x4xf32> to vector<4x4xf32>
      %cst_91 = arith.constant dense<0.000000e+00> : vector<4x128xf32>
      %107 = tpu.matmul %106, %104, %cst_91 {dimension_numbers = #tpu.dot_dimension_numbers<[1], [0], [0], [1], [0, 0, 1, 1], [], []>} : vector<4x4xf32>, vector<4x128xf32>, vector<4x128xf32> -> vector<4x128xf32>
      %c1_92 = arith.constant 1 : index
      %c1_93 = arith.constant 1 : index
      %c0_94 = arith.constant 0 : index
      %c0_95 = arith.constant 0 : index
      %108 = vector.load %arg3[%c1_92, %c1_93, %c0_94, %c0_95] : memref<8x3x4x12xf32, #tpu.memory_space<vmem>>, vector<1x1x4x4xf32>
      %109 = vector.shape_cast %108 : vector<1x1x4x4xf32> to vector<4x4xf32>
      %cst_96 = arith.constant dense<0.000000e+00> : vector<4x128xf32>
      %110 = tpu.matmul %109, %104, %cst_96 {dimension_numbers = #tpu.dot_dimension_numbers<[1], [0], [0], [1], [0, 0, 1, 1], [], []>} : vector<4x4xf32>, vector<4x128xf32>, vector<4x128xf32> -> vector<4x128xf32>
      %c1_97 = arith.constant 1 : index
      %c2_98 = arith.constant 2 : index
      %c0_99 = arith.constant 0 : index
      %c0_100 = arith.constant 0 : index
      %111 = vector.load %arg3[%c1_97, %c2_98, %c0_99, %c0_100] : memref<8x3x4x12xf32, #tpu.memory_space<vmem>>, vector<1x1x4x4xf32>
      %112 = vector.shape_cast %111 : vector<1x1x4x4xf32> to vector<4x4xf32>
      %cst_101 = arith.constant dense<0.000000e+00> : vector<4x128xf32>
      %113 = tpu.matmul %112, %104, %cst_101 {dimension_numbers = #tpu.dot_dimension_numbers<[1], [0], [0], [1], [0, 0, 1, 1], [], []>} : vector<4x4xf32>, vector<4x128xf32>, vector<4x128xf32> -> vector<4x128xf32>
      %c1_i32_102 = arith.constant 1 : i32
      %114 = tpu.dynamic_rotate %107 by %c1_i32_102 dim 1 : vector<4x128xf32>, i32 -> vector<4x128xf32>
      %115 = vector.broadcast %77 : vector<1x128xf32> to vector<4x128xf32>
      %116 = arith.mulf %114, %115 : vector<4x128xf32>
      %117 = arith.addf %116, %110 : vector<4x128xf32>
      %c127_i32_103 = arith.constant 127 : i32
      %118 = tpu.dynamic_rotate %113 by %c127_i32_103 dim 1 : vector<4x128xf32>, i32 -> vector<4x128xf32>
      %119 = vector.broadcast %81 : vector<1x128xf32> to vector<4x128xf32>
      %120 = arith.mulf %118, %119 : vector<4x128xf32>
      %121 = arith.addf %117, %120 : vector<4x128xf32>
      %c1_104 = arith.constant 1 : index
      %c0_105 = arith.constant 0 : index
      %c0_106 = arith.constant 0 : index
      %122 = vector.load %arg4[%c1_104, %c0_105, %c0_106] : memref<8x4x1xf32, #tpu.memory_space<vmem>>, vector<1x4x1xf32>
      %123 = vector.shape_cast %122 : vector<1x4x1xf32> to vector<4x1xf32>
      %124 = vector.broadcast %123 : vector<4x1xf32> to vector<4x128xf32>
      %125 = arith.addf %121, %124 : vector<4x128xf32>
      %cst_107 = arith.constant 0.000000e+00 : f32
      %126 = vector.broadcast %cst_107 : f32 to vector<4x128xf32>
      %127 = arith.maximumf %125, %126 : vector<4x128xf32>
      %128 = arith.mulf %127, %56 : vector<4x128xf32>
      %c2_108 = arith.constant 2 : index
      %c0_109 = arith.constant 0 : index
      %c0_110 = arith.constant 0 : index
      %c0_111 = arith.constant 0 : index
      %129 = vector.load %arg3[%c2_108, %c0_109, %c0_110, %c0_111] : memref<8x3x4x12xf32, #tpu.memory_space<vmem>>, vector<1x1x4x4xf32>
      %130 = vector.shape_cast %129 : vector<1x1x4x4xf32> to vector<4x4xf32>
      %cst_112 = arith.constant dense<0.000000e+00> : vector<4x128xf32>
      %131 = tpu.matmul %130, %128, %cst_112 {dimension_numbers = #tpu.dot_dimension_numbers<[1], [0], [0], [1], [0, 0, 1, 1], [], []>} : vector<4x4xf32>, vector<4x128xf32>, vector<4x128xf32> -> vector<4x128xf32>
      %c2_113 = arith.constant 2 : index
      %c1_114 = arith.constant 1 : index
      %c0_115 = arith.constant 0 : index
      %c0_116 = arith.constant 0 : index
      %132 = vector.load %arg3[%c2_113, %c1_114, %c0_115, %c0_116] : memref<8x3x4x12xf32, #tpu.memory_space<vmem>>, vector<1x1x4x4xf32>
      %133 = vector.shape_cast %132 : vector<1x1x4x4xf32> to vector<4x4xf32>
      %cst_117 = arith.constant dense<0.000000e+00> : vector<4x128xf32>
      %134 = tpu.matmul %133, %128, %cst_117 {dimension_numbers = #tpu.dot_dimension_numbers<[1], [0], [0], [1], [0, 0, 1, 1], [], []>} : vector<4x4xf32>, vector<4x128xf32>, vector<4x128xf32> -> vector<4x128xf32>
      %c2_118 = arith.constant 2 : index
      %c2_119 = arith.constant 2 : index
      %c0_120 = arith.constant 0 : index
      %c0_121 = arith.constant 0 : index
      %135 = vector.load %arg3[%c2_118, %c2_119, %c0_120, %c0_121] : memref<8x3x4x12xf32, #tpu.memory_space<vmem>>, vector<1x1x4x4xf32>
      %136 = vector.shape_cast %135 : vector<1x1x4x4xf32> to vector<4x4xf32>
      %cst_122 = arith.constant dense<0.000000e+00> : vector<4x128xf32>
      %137 = tpu.matmul %136, %128, %cst_122 {dimension_numbers = #tpu.dot_dimension_numbers<[1], [0], [0], [1], [0, 0, 1, 1], [], []>} : vector<4x4xf32>, vector<4x128xf32>, vector<4x128xf32> -> vector<4x128xf32>
      %c1_i32_123 = arith.constant 1 : i32
      %138 = tpu.dynamic_rotate %131 by %c1_i32_123 dim 1 : vector<4x128xf32>, i32 -> vector<4x128xf32>
      %139 = vector.broadcast %77 : vector<1x128xf32> to vector<4x128xf32>
      %140 = arith.mulf %138, %139 : vector<4x128xf32>
      %141 = arith.addf %140, %134 : vector<4x128xf32>
      %c127_i32_124 = arith.constant 127 : i32
      %142 = tpu.dynamic_rotate %137 by %c127_i32_124 dim 1 : vector<4x128xf32>, i32 -> vector<4x128xf32>
      %143 = vector.broadcast %81 : vector<1x128xf32> to vector<4x128xf32>
      %144 = arith.mulf %142, %143 : vector<4x128xf32>
      %145 = arith.addf %141, %144 : vector<4x128xf32>
      %c2_125 = arith.constant 2 : index
      %c0_126 = arith.constant 0 : index
      %c0_127 = arith.constant 0 : index
      %146 = vector.load %arg4[%c2_125, %c0_126, %c0_127] : memref<8x4x1xf32, #tpu.memory_space<vmem>>, vector<1x4x1xf32>
      %147 = vector.shape_cast %146 : vector<1x4x1xf32> to vector<4x1xf32>
      %148 = vector.broadcast %147 : vector<4x1xf32> to vector<4x128xf32>
      %149 = arith.addf %145, %148 : vector<4x128xf32>
      %cst_128 = arith.constant 0.000000e+00 : f32
      %150 = vector.broadcast %cst_128 : f32 to vector<4x128xf32>
      %151 = arith.maximumf %149, %150 : vector<4x128xf32>
      %c3_129 = arith.constant 3 : index
      %c0_130 = arith.constant 0 : index
      %c0_131 = arith.constant 0 : index
      %c0_132 = arith.constant 0 : index
      %152 = vector.load %arg3[%c3_129, %c0_130, %c0_131, %c0_132] : memref<8x3x4x12xf32, #tpu.memory_space<vmem>>, vector<1x1x4x4xf32>
      %153 = vector.shape_cast %152 : vector<1x1x4x4xf32> to vector<4x4xf32>
      %cst_133 = arith.constant dense<0.000000e+00> : vector<4x128xf32>
      %154 = tpu.matmul %153, %151, %cst_133 {dimension_numbers = #tpu.dot_dimension_numbers<[1], [0], [0], [1], [0, 0, 1, 1], [], []>} : vector<4x4xf32>, vector<4x128xf32>, vector<4x128xf32> -> vector<4x128xf32>
      %c3_134 = arith.constant 3 : index
      %c1_135 = arith.constant 1 : index
      %c0_136 = arith.constant 0 : index
      %c0_137 = arith.constant 0 : index
      %155 = vector.load %arg3[%c3_134, %c1_135, %c0_136, %c0_137] : memref<8x3x4x12xf32, #tpu.memory_space<vmem>>, vector<1x1x4x4xf32>
      %156 = vector.shape_cast %155 : vector<1x1x4x4xf32> to vector<4x4xf32>
      %cst_138 = arith.constant dense<0.000000e+00> : vector<4x128xf32>
      %157 = tpu.matmul %156, %151, %cst_138 {dimension_numbers = #tpu.dot_dimension_numbers<[1], [0], [0], [1], [0, 0, 1, 1], [], []>} : vector<4x4xf32>, vector<4x128xf32>, vector<4x128xf32> -> vector<4x128xf32>
      %c3_139 = arith.constant 3 : index
      %c2_140 = arith.constant 2 : index
      %c0_141 = arith.constant 0 : index
      %c0_142 = arith.constant 0 : index
      %158 = vector.load %arg3[%c3_139, %c2_140, %c0_141, %c0_142] : memref<8x3x4x12xf32, #tpu.memory_space<vmem>>, vector<1x1x4x4xf32>
      %159 = vector.shape_cast %158 : vector<1x1x4x4xf32> to vector<4x4xf32>
      %cst_143 = arith.constant dense<0.000000e+00> : vector<4x128xf32>
      %160 = tpu.matmul %159, %151, %cst_143 {dimension_numbers = #tpu.dot_dimension_numbers<[1], [0], [0], [1], [0, 0, 1, 1], [], []>} : vector<4x4xf32>, vector<4x128xf32>, vector<4x128xf32> -> vector<4x128xf32>
      %c1_i32_144 = arith.constant 1 : i32
      %161 = tpu.dynamic_rotate %154 by %c1_i32_144 dim 1 : vector<4x128xf32>, i32 -> vector<4x128xf32>
      %162 = vector.broadcast %77 : vector<1x128xf32> to vector<4x128xf32>
      %163 = arith.mulf %161, %162 : vector<4x128xf32>
      %164 = arith.addf %163, %157 : vector<4x128xf32>
      %c127_i32_145 = arith.constant 127 : i32
      %165 = tpu.dynamic_rotate %160 by %c127_i32_145 dim 1 : vector<4x128xf32>, i32 -> vector<4x128xf32>
      %166 = vector.broadcast %81 : vector<1x128xf32> to vector<4x128xf32>
      %167 = arith.mulf %165, %166 : vector<4x128xf32>
      %168 = arith.addf %164, %167 : vector<4x128xf32>
      %c3_146 = arith.constant 3 : index
      %c0_147 = arith.constant 0 : index
      %c0_148 = arith.constant 0 : index
      %169 = vector.load %arg4[%c3_146, %c0_147, %c0_148] : memref<8x4x1xf32, #tpu.memory_space<vmem>>, vector<1x4x1xf32>
      %170 = vector.shape_cast %169 : vector<1x4x1xf32> to vector<4x1xf32>
      %171 = vector.broadcast %170 : vector<4x1xf32> to vector<4x128xf32>
      %172 = arith.addf %168, %171 : vector<4x128xf32>
      %cst_149 = arith.constant 0.000000e+00 : f32
      %173 = vector.broadcast %cst_149 : f32 to vector<4x128xf32>
      %174 = arith.maximumf %172, %173 : vector<4x128xf32>
      %175 = arith.mulf %174, %128 : vector<4x128xf32>
      %c4_150 = arith.constant 4 : index
      %c0_151 = arith.constant 0 : index
      %c0_152 = arith.constant 0 : index
      %c0_153 = arith.constant 0 : index
      %176 = vector.load %arg3[%c4_150, %c0_151, %c0_152, %c0_153] : memref<8x3x4x12xf32, #tpu.memory_space<vmem>>, vector<1x1x4x4xf32>
      %177 = vector.shape_cast %176 : vector<1x1x4x4xf32> to vector<4x4xf32>
      %cst_154 = arith.constant dense<0.000000e+00> : vector<4x128xf32>
      %178 = tpu.matmul %177, %175, %cst_154 {dimension_numbers = #tpu.dot_dimension_numbers<[1], [0], [0], [1], [0, 0, 1, 1], [], []>} : vector<4x4xf32>, vector<4x128xf32>, vector<4x128xf32> -> vector<4x128xf32>
      %c4_155 = arith.constant 4 : index
      %c1_156 = arith.constant 1 : index
      %c0_157 = arith.constant 0 : index
      %c0_158 = arith.constant 0 : index
      %179 = vector.load %arg3[%c4_155, %c1_156, %c0_157, %c0_158] : memref<8x3x4x12xf32, #tpu.memory_space<vmem>>, vector<1x1x4x4xf32>
      %180 = vector.shape_cast %179 : vector<1x1x4x4xf32> to vector<4x4xf32>
      %cst_159 = arith.constant dense<0.000000e+00> : vector<4x128xf32>
      %181 = tpu.matmul %180, %175, %cst_159 {dimension_numbers = #tpu.dot_dimension_numbers<[1], [0], [0], [1], [0, 0, 1, 1], [], []>} : vector<4x4xf32>, vector<4x128xf32>, vector<4x128xf32> -> vector<4x128xf32>
      %c4_160 = arith.constant 4 : index
      %c2_161 = arith.constant 2 : index
      %c0_162 = arith.constant 0 : index
      %c0_163 = arith.constant 0 : index
      %182 = vector.load %arg3[%c4_160, %c2_161, %c0_162, %c0_163] : memref<8x3x4x12xf32, #tpu.memory_space<vmem>>, vector<1x1x4x4xf32>
      %183 = vector.shape_cast %182 : vector<1x1x4x4xf32> to vector<4x4xf32>
      %cst_164 = arith.constant dense<0.000000e+00> : vector<4x128xf32>
      %184 = tpu.matmul %183, %175, %cst_164 {dimension_numbers = #tpu.dot_dimension_numbers<[1], [0], [0], [1], [0, 0, 1, 1], [], []>} : vector<4x4xf32>, vector<4x128xf32>, vector<4x128xf32> -> vector<4x128xf32>
      %c1_i32_165 = arith.constant 1 : i32
      %185 = tpu.dynamic_rotate %178 by %c1_i32_165 dim 1 : vector<4x128xf32>, i32 -> vector<4x128xf32>
      %186 = vector.broadcast %77 : vector<1x128xf32> to vector<4x128xf32>
      %187 = arith.mulf %185, %186 : vector<4x128xf32>
      %188 = arith.addf %187, %181 : vector<4x128xf32>
      %c127_i32_166 = arith.constant 127 : i32
      %189 = tpu.dynamic_rotate %184 by %c127_i32_166 dim 1 : vector<4x128xf32>, i32 -> vector<4x128xf32>
      %190 = vector.broadcast %81 : vector<1x128xf32> to vector<4x128xf32>
      %191 = arith.mulf %189, %190 : vector<4x128xf32>
      %192 = arith.addf %188, %191 : vector<4x128xf32>
      %c4_167 = arith.constant 4 : index
      %c0_168 = arith.constant 0 : index
      %c0_169 = arith.constant 0 : index
      %193 = vector.load %arg4[%c4_167, %c0_168, %c0_169] : memref<8x4x1xf32, #tpu.memory_space<vmem>>, vector<1x4x1xf32>
      %194 = vector.shape_cast %193 : vector<1x4x1xf32> to vector<4x1xf32>
      %195 = vector.broadcast %194 : vector<4x1xf32> to vector<4x128xf32>
      %196 = arith.addf %192, %195 : vector<4x128xf32>
      %cst_170 = arith.constant 0.000000e+00 : f32
      %197 = vector.broadcast %cst_170 : f32 to vector<4x128xf32>
      %198 = arith.maximumf %196, %197 : vector<4x128xf32>
      %c5_171 = arith.constant 5 : index
      %c0_172 = arith.constant 0 : index
      %c0_173 = arith.constant 0 : index
      %c0_174 = arith.constant 0 : index
      %199 = vector.load %arg3[%c5_171, %c0_172, %c0_173, %c0_174] : memref<8x3x4x12xf32, #tpu.memory_space<vmem>>, vector<1x1x4x4xf32>
      %200 = vector.shape_cast %199 : vector<1x1x4x4xf32> to vector<4x4xf32>
      %cst_175 = arith.constant dense<0.000000e+00> : vector<4x128xf32>
      %201 = tpu.matmul %200, %198, %cst_175 {dimension_numbers = #tpu.dot_dimension_numbers<[1], [0], [0], [1], [0, 0, 1, 1], [], []>} : vector<4x4xf32>, vector<4x128xf32>, vector<4x128xf32> -> vector<4x128xf32>
      %c5_176 = arith.constant 5 : index
      %c1_177 = arith.constant 1 : index
      %c0_178 = arith.constant 0 : index
      %c0_179 = arith.constant 0 : index
      %202 = vector.load %arg3[%c5_176, %c1_177, %c0_178, %c0_179] : memref<8x3x4x12xf32, #tpu.memory_space<vmem>>, vector<1x1x4x4xf32>
      %203 = vector.shape_cast %202 : vector<1x1x4x4xf32> to vector<4x4xf32>
      %cst_180 = arith.constant dense<0.000000e+00> : vector<4x128xf32>
      %204 = tpu.matmul %203, %198, %cst_180 {dimension_numbers = #tpu.dot_dimension_numbers<[1], [0], [0], [1], [0, 0, 1, 1], [], []>} : vector<4x4xf32>, vector<4x128xf32>, vector<4x128xf32> -> vector<4x128xf32>
      %c5_181 = arith.constant 5 : index
      %c2_182 = arith.constant 2 : index
      %c0_183 = arith.constant 0 : index
      %c0_184 = arith.constant 0 : index
      %205 = vector.load %arg3[%c5_181, %c2_182, %c0_183, %c0_184] : memref<8x3x4x12xf32, #tpu.memory_space<vmem>>, vector<1x1x4x4xf32>
      %206 = vector.shape_cast %205 : vector<1x1x4x4xf32> to vector<4x4xf32>
      %cst_185 = arith.constant dense<0.000000e+00> : vector<4x128xf32>
      %207 = tpu.matmul %206, %198, %cst_185 {dimension_numbers = #tpu.dot_dimension_numbers<[1], [0], [0], [1], [0, 0, 1, 1], [], []>} : vector<4x4xf32>, vector<4x128xf32>, vector<4x128xf32> -> vector<4x128xf32>
      %c1_i32_186 = arith.constant 1 : i32
      %208 = tpu.dynamic_rotate %201 by %c1_i32_186 dim 1 : vector<4x128xf32>, i32 -> vector<4x128xf32>
      %209 = vector.broadcast %77 : vector<1x128xf32> to vector<4x128xf32>
      %210 = arith.mulf %208, %209 : vector<4x128xf32>
      %211 = arith.addf %210, %204 : vector<4x128xf32>
      %c127_i32_187 = arith.constant 127 : i32
      %212 = tpu.dynamic_rotate %207 by %c127_i32_187 dim 1 : vector<4x128xf32>, i32 -> vector<4x128xf32>
      %213 = vector.broadcast %81 : vector<1x128xf32> to vector<4x128xf32>
      %214 = arith.mulf %212, %213 : vector<4x128xf32>
      %215 = arith.addf %211, %214 : vector<4x128xf32>
      %c5_188 = arith.constant 5 : index
      %c0_189 = arith.constant 0 : index
      %c0_190 = arith.constant 0 : index
      %216 = vector.load %arg4[%c5_188, %c0_189, %c0_190] : memref<8x4x1xf32, #tpu.memory_space<vmem>>, vector<1x4x1xf32>
      %217 = vector.shape_cast %216 : vector<1x4x1xf32> to vector<4x1xf32>
      %218 = vector.broadcast %217 : vector<4x1xf32> to vector<4x128xf32>
      %219 = arith.addf %215, %218 : vector<4x128xf32>
      %cst_191 = arith.constant 0.000000e+00 : f32
      %220 = vector.broadcast %cst_191 : f32 to vector<4x128xf32>
      %221 = arith.maximumf %219, %220 : vector<4x128xf32>
      %222 = arith.mulf %221, %175 : vector<4x128xf32>
      %c6_192 = arith.constant 6 : index
      %c0_193 = arith.constant 0 : index
      %c0_194 = arith.constant 0 : index
      %c0_195 = arith.constant 0 : index
      %223 = vector.load %arg3[%c6_192, %c0_193, %c0_194, %c0_195] : memref<8x3x4x12xf32, #tpu.memory_space<vmem>>, vector<1x1x4x4xf32>
      %224 = vector.shape_cast %223 : vector<1x1x4x4xf32> to vector<4x4xf32>
      %cst_196 = arith.constant dense<0.000000e+00> : vector<4x128xf32>
      %225 = tpu.matmul %224, %128, %cst_196 {dimension_numbers = #tpu.dot_dimension_numbers<[1], [0], [0], [1], [0, 0, 1, 1], [], []>} : vector<4x4xf32>, vector<4x128xf32>, vector<4x128xf32> -> vector<4x128xf32>
      %c6_197 = arith.constant 6 : index
      %c0_198 = arith.constant 0 : index
      %c0_199 = arith.constant 0 : index
      %c4_200 = arith.constant 4 : index
      %226 = vector.load %arg3[%c6_197, %c0_198, %c0_199, %c4_200] : memref<8x3x4x12xf32, #tpu.memory_space<vmem>>, vector<1x1x4x4xf32>
      %227 = vector.shape_cast %226 : vector<1x1x4x4xf32> to vector<4x4xf32>
      %cst_201 = arith.constant dense<0.000000e+00> : vector<4x128xf32>
      %228 = tpu.matmul %227, %175, %cst_201 {dimension_numbers = #tpu.dot_dimension_numbers<[1], [0], [0], [1], [0, 0, 1, 1], [], []>} : vector<4x4xf32>, vector<4x128xf32>, vector<4x128xf32> -> vector<4x128xf32>
      %229 = arith.addf %225, %228 : vector<4x128xf32>
      %c6_202 = arith.constant 6 : index
      %c0_203 = arith.constant 0 : index
      %c0_204 = arith.constant 0 : index
      %c8 = arith.constant 8 : index
      %230 = vector.load %arg3[%c6_202, %c0_203, %c0_204, %c8] : memref<8x3x4x12xf32, #tpu.memory_space<vmem>>, vector<1x1x4x4xf32>
      %231 = vector.shape_cast %230 : vector<1x1x4x4xf32> to vector<4x4xf32>
      %cst_205 = arith.constant dense<0.000000e+00> : vector<4x128xf32>
      %232 = tpu.matmul %231, %222, %cst_205 {dimension_numbers = #tpu.dot_dimension_numbers<[1], [0], [0], [1], [0, 0, 1, 1], [], []>} : vector<4x4xf32>, vector<4x128xf32>, vector<4x128xf32> -> vector<4x128xf32>
      %233 = arith.addf %229, %232 : vector<4x128xf32>
      %c6_206 = arith.constant 6 : index
      %c1_207 = arith.constant 1 : index
      %c0_208 = arith.constant 0 : index
      %c0_209 = arith.constant 0 : index
      %234 = vector.load %arg3[%c6_206, %c1_207, %c0_208, %c0_209] : memref<8x3x4x12xf32, #tpu.memory_space<vmem>>, vector<1x1x4x4xf32>
      %235 = vector.shape_cast %234 : vector<1x1x4x4xf32> to vector<4x4xf32>
      %cst_210 = arith.constant dense<0.000000e+00> : vector<4x128xf32>
      %236 = tpu.matmul %235, %128, %cst_210 {dimension_numbers = #tpu.dot_dimension_numbers<[1], [0], [0], [1], [0, 0, 1, 1], [], []>} : vector<4x4xf32>, vector<4x128xf32>, vector<4x128xf32> -> vector<4x128xf32>
      %c6_211 = arith.constant 6 : index
      %c1_212 = arith.constant 1 : index
      %c0_213 = arith.constant 0 : index
      %c4_214 = arith.constant 4 : index
      %237 = vector.load %arg3[%c6_211, %c1_212, %c0_213, %c4_214] : memref<8x3x4x12xf32, #tpu.memory_space<vmem>>, vector<1x1x4x4xf32>
      %238 = vector.shape_cast %237 : vector<1x1x4x4xf32> to vector<4x4xf32>
      %cst_215 = arith.constant dense<0.000000e+00> : vector<4x128xf32>
      %239 = tpu.matmul %238, %175, %cst_215 {dimension_numbers = #tpu.dot_dimension_numbers<[1], [0], [0], [1], [0, 0, 1, 1], [], []>} : vector<4x4xf32>, vector<4x128xf32>, vector<4x128xf32> -> vector<4x128xf32>
      %240 = arith.addf %236, %239 : vector<4x128xf32>
      %c6_216 = arith.constant 6 : index
      %c1_217 = arith.constant 1 : index
      %c0_218 = arith.constant 0 : index
      %c8_219 = arith.constant 8 : index
      %241 = vector.load %arg3[%c6_216, %c1_217, %c0_218, %c8_219] : memref<8x3x4x12xf32, #tpu.memory_space<vmem>>, vector<1x1x4x4xf32>
      %242 = vector.shape_cast %241 : vector<1x1x4x4xf32> to vector<4x4xf32>
      %cst_220 = arith.constant dense<0.000000e+00> : vector<4x128xf32>
      %243 = tpu.matmul %242, %222, %cst_220 {dimension_numbers = #tpu.dot_dimension_numbers<[1], [0], [0], [1], [0, 0, 1, 1], [], []>} : vector<4x4xf32>, vector<4x128xf32>, vector<4x128xf32> -> vector<4x128xf32>
      %244 = arith.addf %240, %243 : vector<4x128xf32>
      %c6_221 = arith.constant 6 : index
      %c2_222 = arith.constant 2 : index
      %c0_223 = arith.constant 0 : index
      %c0_224 = arith.constant 0 : index
      %245 = vector.load %arg3[%c6_221, %c2_222, %c0_223, %c0_224] : memref<8x3x4x12xf32, #tpu.memory_space<vmem>>, vector<1x1x4x4xf32>
      %246 = vector.shape_cast %245 : vector<1x1x4x4xf32> to vector<4x4xf32>
      %cst_225 = arith.constant dense<0.000000e+00> : vector<4x128xf32>
      %247 = tpu.matmul %246, %128, %cst_225 {dimension_numbers = #tpu.dot_dimension_numbers<[1], [0], [0], [1], [0, 0, 1, 1], [], []>} : vector<4x4xf32>, vector<4x128xf32>, vector<4x128xf32> -> vector<4x128xf32>
      %c6_226 = arith.constant 6 : index
      %c2_227 = arith.constant 2 : index
      %c0_228 = arith.constant 0 : index
      %c4_229 = arith.constant 4 : index
      %248 = vector.load %arg3[%c6_226, %c2_227, %c0_228, %c4_229] : memref<8x3x4x12xf32, #tpu.memory_space<vmem>>, vector<1x1x4x4xf32>
      %249 = vector.shape_cast %248 : vector<1x1x4x4xf32> to vector<4x4xf32>
      %cst_230 = arith.constant dense<0.000000e+00> : vector<4x128xf32>
      %250 = tpu.matmul %249, %175, %cst_230 {dimension_numbers = #tpu.dot_dimension_numbers<[1], [0], [0], [1], [0, 0, 1, 1], [], []>} : vector<4x4xf32>, vector<4x128xf32>, vector<4x128xf32> -> vector<4x128xf32>
      %251 = arith.addf %247, %250 : vector<4x128xf32>
      %c6_231 = arith.constant 6 : index
      %c2_232 = arith.constant 2 : index
      %c0_233 = arith.constant 0 : index
      %c8_234 = arith.constant 8 : index
      %252 = vector.load %arg3[%c6_231, %c2_232, %c0_233, %c8_234] : memref<8x3x4x12xf32, #tpu.memory_space<vmem>>, vector<1x1x4x4xf32>
      %253 = vector.shape_cast %252 : vector<1x1x4x4xf32> to vector<4x4xf32>
      %cst_235 = arith.constant dense<0.000000e+00> : vector<4x128xf32>
      %254 = tpu.matmul %253, %222, %cst_235 {dimension_numbers = #tpu.dot_dimension_numbers<[1], [0], [0], [1], [0, 0, 1, 1], [], []>} : vector<4x4xf32>, vector<4x128xf32>, vector<4x128xf32> -> vector<4x128xf32>
      %255 = arith.addf %251, %254 : vector<4x128xf32>
      %c1_i32_236 = arith.constant 1 : i32
      %256 = tpu.dynamic_rotate %233 by %c1_i32_236 dim 1 : vector<4x128xf32>, i32 -> vector<4x128xf32>
      %257 = vector.broadcast %77 : vector<1x128xf32> to vector<4x128xf32>
      %258 = arith.mulf %256, %257 : vector<4x128xf32>
      %259 = arith.addf %258, %244 : vector<4x128xf32>
      %c127_i32_237 = arith.constant 127 : i32
      %260 = tpu.dynamic_rotate %255 by %c127_i32_237 dim 1 : vector<4x128xf32>, i32 -> vector<4x128xf32>
      %261 = vector.broadcast %81 : vector<1x128xf32> to vector<4x128xf32>
      %262 = arith.mulf %260, %261 : vector<4x128xf32>
      %263 = arith.addf %259, %262 : vector<4x128xf32>
      %c6_238 = arith.constant 6 : index
      %c0_239 = arith.constant 0 : index
      %c0_240 = arith.constant 0 : index
      %264 = vector.load %arg4[%c6_238, %c0_239, %c0_240] : memref<8x4x1xf32, #tpu.memory_space<vmem>>, vector<1x4x1xf32>
      %265 = vector.shape_cast %264 : vector<1x4x1xf32> to vector<4x1xf32>
      %266 = vector.broadcast %265 : vector<4x1xf32> to vector<4x128xf32>
      %267 = arith.addf %263, %266 : vector<4x128xf32>
      %cst_241 = arith.constant 0.000000e+00 : f32
      %268 = vector.broadcast %cst_241 : f32 to vector<4x128xf32>
      %269 = arith.maximumf %267, %268 : vector<4x128xf32>
      %c7_242 = arith.constant 7 : index
      %c0_243 = arith.constant 0 : index
      %c0_244 = arith.constant 0 : index
      %c0_245 = arith.constant 0 : index
      %270 = vector.load %arg3[%c7_242, %c0_243, %c0_244, %c0_245] : memref<8x3x4x12xf32, #tpu.memory_space<vmem>>, vector<1x1x4x4xf32>
      %271 = vector.shape_cast %270 : vector<1x1x4x4xf32> to vector<4x4xf32>
      %cst_246 = arith.constant dense<0.000000e+00> : vector<4x128xf32>
      %272 = tpu.matmul %271, %269, %cst_246 {dimension_numbers = #tpu.dot_dimension_numbers<[1], [0], [0], [1], [0, 0, 1, 1], [], []>} : vector<4x4xf32>, vector<4x128xf32>, vector<4x128xf32> -> vector<4x128xf32>
      %c7_247 = arith.constant 7 : index
      %c1_248 = arith.constant 1 : index
      %c0_249 = arith.constant 0 : index
      %c0_250 = arith.constant 0 : index
      %273 = vector.load %arg3[%c7_247, %c1_248, %c0_249, %c0_250] : memref<8x3x4x12xf32, #tpu.memory_space<vmem>>, vector<1x1x4x4xf32>
      %274 = vector.shape_cast %273 : vector<1x1x4x4xf32> to vector<4x4xf32>
      %cst_251 = arith.constant dense<0.000000e+00> : vector<4x128xf32>
      %275 = tpu.matmul %274, %269, %cst_251 {dimension_numbers = #tpu.dot_dimension_numbers<[1], [0], [0], [1], [0, 0, 1, 1], [], []>} : vector<4x4xf32>, vector<4x128xf32>, vector<4x128xf32> -> vector<4x128xf32>
      %c7_252 = arith.constant 7 : index
      %c2_253 = arith.constant 2 : index
      %c0_254 = arith.constant 0 : index
      %c0_255 = arith.constant 0 : index
      %276 = vector.load %arg3[%c7_252, %c2_253, %c0_254, %c0_255] : memref<8x3x4x12xf32, #tpu.memory_space<vmem>>, vector<1x1x4x4xf32>
      %277 = vector.shape_cast %276 : vector<1x1x4x4xf32> to vector<4x4xf32>
      %cst_256 = arith.constant dense<0.000000e+00> : vector<4x128xf32>
      %278 = tpu.matmul %277, %269, %cst_256 {dimension_numbers = #tpu.dot_dimension_numbers<[1], [0], [0], [1], [0, 0, 1, 1], [], []>} : vector<4x4xf32>, vector<4x128xf32>, vector<4x128xf32> -> vector<4x128xf32>
      %c1_i32_257 = arith.constant 1 : i32
      %279 = tpu.dynamic_rotate %272 by %c1_i32_257 dim 1 : vector<4x128xf32>, i32 -> vector<4x128xf32>
      %280 = vector.broadcast %77 : vector<1x128xf32> to vector<4x128xf32>
      %281 = arith.mulf %279, %280 : vector<4x128xf32>
      %282 = arith.addf %281, %275 : vector<4x128xf32>
      %c127_i32_258 = arith.constant 127 : i32
      %283 = tpu.dynamic_rotate %278 by %c127_i32_258 dim 1 : vector<4x128xf32>, i32 -> vector<4x128xf32>
      %284 = vector.broadcast %81 : vector<1x128xf32> to vector<4x128xf32>
      %285 = arith.mulf %283, %284 : vector<4x128xf32>
      %286 = arith.addf %282, %285 : vector<4x128xf32>
      %c7_259 = arith.constant 7 : index
      %c0_260 = arith.constant 0 : index
      %c0_261 = arith.constant 0 : index
      %287 = vector.load %arg4[%c7_259, %c0_260, %c0_261] : memref<8x4x1xf32, #tpu.memory_space<vmem>>, vector<1x4x1xf32>
      %288 = vector.shape_cast %287 : vector<1x4x1xf32> to vector<4x1xf32>
      %289 = vector.broadcast %288 : vector<4x1xf32> to vector<4x128xf32>
      %290 = arith.addf %286, %289 : vector<4x128xf32>
      %cst_262 = arith.constant 0.000000e+00 : f32
      %291 = vector.broadcast %cst_262 : f32 to vector<4x128xf32>
      %292 = arith.maximumf %290, %291 : vector<4x128xf32>
      %c0_263 = arith.constant 0 : index
      %c0_264 = arith.constant 0 : index
      %293 = vector.load %arg5[%c0_263, %c0_264] : memref<4x128xf32, #tpu.memory_space<vmem>>, vector<4x128xf32>
      tpu.vector_store %arg5[%c0_263, %c0_264], %292 {strides = array<i32>} : memref<4x128xf32, #tpu.memory_space<vmem>>, vector<4x128xf32>,
    } else {
    }
    return
  }
  func.func @transform_0(%arg0: i32, %arg1: i32) -> (i32, i32, i32, i32) {
    %c0_i32 = arith.constant 0 : i32
    %c0_i32_0 = arith.constant 0 : i32
    %c0_i32_1 = arith.constant 0 : i32
    return %arg0, %c0_i32, %c0_i32_0, %arg1 : i32, i32, i32, i32
  }
  func.func @transform_1(%arg0: i32, %arg1: i32) -> (i32, i32, i32, i32) {
    %c0_i32 = arith.constant 0 : i32
    %c0_i32_0 = arith.constant 0 : i32
    %c0_i32_1 = arith.constant 0 : i32
    %c0_i32_2 = arith.constant 0 : i32
    %c0_i32_3 = arith.constant 0 : i32
    return %c0_i32, %c0_i32_0, %c0_i32_1, %c0_i32_2 : i32, i32, i32, i32
  }
  func.func @transform_2(%arg0: i32, %arg1: i32) -> (i32, i32, i32) {
    %c0_i32 = arith.constant 0 : i32
    %c0_i32_0 = arith.constant 0 : i32
    %c0_i32_1 = arith.constant 0 : i32
    %c0_i32_2 = arith.constant 0 : i32
    return %c0_i32, %c0_i32_0, %c0_i32_1 : i32, i32, i32
  }
  func.func @transform_3(%arg0: i32, %arg1: i32) -> (i32, i32) {
    %c0_i32 = arith.constant 0 : i32
    %c0_i32_0 = arith.constant 0 : i32
    return %c0_i32, %arg0 : i32, i32
  }
}

</mosaic_0001>

<llo_original>
// kernel: tpu_custom_call.1
$region0: #{tpu_custom_call.1}
  #allocation0 [shape = 'u32[]', space=smem, size = 0x4, offset = 0x4, fixed_abs, tag = 'smem constant byte address 0x4 - core index']
  #allocation1 [shape = 'u32[72,128]{1,0:T(1,128)}', space=vmem, size = 0x9000, scoped, tag = 'internal scratch']
  #allocation2 [shape = 'f32[4,128]{1,0:T(4,128)}', space=vmem, size = 0x800, scoped, tag = 'scratch operand']
  %s0 = inlined_call_operand.hbm [shape: f32[8,4,16,16], index: 0, kind: input, shape index: {}]
  %s1 = inlined_call_operand.hbm [shape: f32[8,3,4,12], index: 1, kind: input, shape index: {}]
  %s2 = inlined_call_operand.vmem [shape: f32[8,4,1], index: 2, kind: input, shape index: {}]
  %s3 = inlined_call_operand.hbm [shape: f32[4,128], index: 3, kind: output, shape index: {}]
  %s4 = sld [smem:[#allocation0]]
  $region38: #{tpu_custom_call.1} parent=0
    _
  %s6 = ssub.s32 1, %s4
  %s7 = scalar_select 0, %s6, %s4
  $region1: #{tpu_custom_call.1} parent=0
    #allocation3 [shape = 'u8[262144]{0}', space=vmem, size = 0x40000, scoped, tag = 'input window, operand 0, single buffered']
    #allocation4 [shape = 's32[1]{0}', space=sflag, size = 0x4, scoped, tag = 'scoped memory for tpu_custom_call.1']
    #allocation5 [shape = 's32[1]{0}', space=sflag, size = 0x4, scoped, tag = 'scoped memory for tpu_custom_call.1']
    #allocation6 [shape = 'u8[49152]{0}', space=vmem, size = 0xc000, scoped, tag = 'input window, operand 1, single buffered']
    #allocation7 [shape = 's32[1]{0}', space=sflag, size = 0x4, scoped, tag = 'scoped memory for tpu_custom_call.1']
    #allocation8 [shape = 'u8[2048]{0}', space=vmem, size = 0x800, scoped, tag = 'output window, operand 0, single buffered']
    %8 = vsyncpa [#allocation4], 0
    %9 = vsyncpa [#allocation7], 0
    %10 = vsyncpa [#allocation5], 0
    // Predicated region
    $region2: #{tpu_custom_call.1} parent=1 // pred_check
      _
    $region3: #{tpu_custom_call.1} parent=1 // pred_check_branch
      %12 = sbr.rel (0) target = $region5
    $region4: #{tpu_custom_call.1} parent=1 // pred_region
      %14 = vsyncadd [#allocation4], 0
      %s15 = sshll.u32 %s0, 4
      %s16 = int_to_ptr.hbm [resolvable:$true] %s15
      %s17 = sshll.u32 [#allocation3], 4
      %s18 = int_to_ptr.vmem [resolvable:$true] %s17
      %23 = dma.hbm_to_vmem [thread:$0]  %s16, 8192, %s18, [#allocation4], 128, 128, 8
    $region5: #{tpu_custom_call.1} parent=1 // pred_fallthru
      _
    // Predicated region
    $region6: #{tpu_custom_call.1} parent=1 // pred_check
      _
    $region7: #{tpu_custom_call.1} parent=1 // pred_check_branch
      %25 = sbr.rel (0) target = $region9
    $region8: #{tpu_custom_call.1} parent=1 // pred_region
      %27 = vsyncadd [#allocation7], 0
      %s28 = sshll.u32 %s1, 4
      %s29 = int_to_ptr.hbm [resolvable:$true] %s28
      %s30 = sshll.u32 [#allocation6], 4
      %s31 = int_to_ptr.vmem [resolvable:$true] %s30
      %36 = dma.hbm_to_vmem [thread:$0]  %s29, 1536, %s31, [#allocation7], 64, 64, 4
    $region9: #{tpu_custom_call.1} parent=1 // pred_fallthru
      _
    // Predicated region
    $region10: #{tpu_custom_call.1} parent=1 // pred_check
      _
    $region11: #{tpu_custom_call.1} parent=1 // pred_check_branch
      %38 = sbr.rel (0) target = $region13
    $region12: #{tpu_custom_call.1} parent=1 // pred_region
      _
    $region13: #{tpu_custom_call.1} parent=1 // pred_fallthru
      _
    // Predicated region
    $region14: #{tpu_custom_call.1} parent=1 // pred_check
      _
    $region15: #{tpu_custom_call.1} parent=1 // pred_check_branch
      %40 = sbr.rel (0) target = $region17
    $region16: #{tpu_custom_call.1} parent=1 // pred_region
      %42 = dma.done [#allocation4], 8192
    $region17: #{tpu_custom_call.1} parent=1 // pred_fallthru
      _
    // Predicated region
    $region18: #{tpu_custom_call.1} parent=1 // pred_check
      _
    $region19: #{tpu_custom_call.1} parent=1 // pred_check_branch
      %44 = sbr.rel (0) target = $region21
    $region20: #{tpu_custom_call.1} parent=1 // pred_region
      %46 = dma.done [#allocation7], 1536
    $region21: #{tpu_custom_call.1} parent=1 // pred_fallthru
      _
    %p47 = scmp.eq.s32.totalorder 0, 0
    // Predicated region
    $region22: #{tpu_custom_call.1} parent=1 // pred_check
      %p48 = pneg %p47
    $region23: #{tpu_custom_call.1} parent=1 // pred_check_branch
      %50 = sbr.rel (%p48) target = $region25
    $region24: #{tpu_custom_call.1} parent=1 // pred_region
      %51 = vst [vmem:[#allocation2] sm:$0xf] 0.0
    $region25: #{tpu_custom_call.1} parent=1 // pred_fallthru
      _
    %v52 = vld [vmem:[#allocation2] sm:$0xf]
    %v53 = vld [vmem:[#allocation3] sm:$0xff]
    %v54 = vld [vmem:[#allocation3 + $0x8] sm:$0xff]
    %v55 = vld [vmem:[#allocation3 + $0x10] sm:$0xff]
    %v56 = vld [vmem:[#allocation3 + $0x18] sm:$0xff]
    %v57 = vld [vmem:[#allocation3 + $0x20] sm:$0xff]
    %v58 = vld [vmem:[#allocation3 + $0x28] sm:$0xff]
    %v59 = vld [vmem:[#allocation3 + $0x30] sm:$0xff]
    %v60 = vld [vmem:[#allocation3 + $0x38] sm:$0xff]
    %vm61 = vcmask 130048
    %v62 = vsel %vm61, %v53, 0.0
    %63 = vadd.xlane.f32.xlu0 %v62
    %v64 = vpop.xlane.xlu0 %63
    %v65 = vsel %vm61, %v54, 0.0
    %66 = vadd.xlane.f32.xlu0 %v65
    %v67 = vpop.xlane.xlu0 %66
    %v68 = vsel %vm61, %v55, 0.0
    %69 = vadd.xlane.f32.xlu0 %v68
    %v70 = vpop.xlane.xlu0 %69
    %v71 = vsel %vm61, %v56, 0.0
    %72 = vadd.xlane.f32.xlu0 %v71
    %v73 = vpop.xlane.xlu0 %72
    %v74 = vsel %vm61, %v57, 0.0
    %75 = vadd.xlane.f32.xlu0 %v74
    %v76 = vpop.xlane.xlu0 %75
    %v77 = vsel %vm61, %v58, 0.0
    %78 = vadd.xlane.f32.xlu0 %v77
    %v79 = vpop.xlane.xlu0 %78
    %v80 = vsel %vm61, %v59, 0.0
    %81 = vadd.xlane.f32.xlu0 %v80
    %v82 = vpop.xlane.xlu0 %81
    %v83 = vsel %vm61, %v60, 0.0
    %84 = vadd.xlane.f32.xlu0 %v83
    %v85 = vpop.xlane.xlu0 %84
    %v94 = vlaneseq
    %v95 = vand.u32 %v94, 127
    %v96 = vperm.slane %v64, %v95
    %v97 = vadd.s32 %v95, 4294967288
    %v98 = vperm.slane %v67, %v97
    %vm99 = vcmask 130112
    %v100 = vsel %vm99, %v98, %v96
    %v101 = vperm.slane %v70, %v95
    %v102 = vperm.slane %v73, %v97
    %v103 = vsel %vm99, %v102, %v101
    %v104 = vperm.slane %v76, %v95
    %v105 = vperm.slane %v79, %v97
    %v106 = vsel %vm99, %v105, %v104
    %v107 = vperm.slane %v82, %v95
    %v108 = vperm.slane %v85, %v97
    %v109 = vsel %vm99, %v108, %v107
    %vm110 = vcmask 1041409
    %v111 = vsel %vm110, %v103, %v100
    %vm112 = vcmask 1042434
    %v113 = vsel %vm112, %v106, %v111
    %vm114 = vcmask 1043459
    %v115 = vsel %vm114, %v109, %v113
    %v117 = vadd.f32 %v52, %v115
    %vm118 = vcmask 125952
    %119 = vst.msk [vmem:[#allocation2] sm:$0xf] %vm118, %v117
    %v120 = vld [vmem:[#allocation2] sm:$0xf]
    %s121 = scalar_lea.vmem [#allocation3], 64
    %v122 = vld [vmem:[%s121] sm:$0xff]
    %v123 = vld [vmem:[%s121 + $0x8] sm:$0xff]
    %v124 = vld [vmem:[%s121 + $0x10] sm:$0xff]
    %v125 = vld [vmem:[%s121 + $0x18] sm:$0xff]
    %v126 = vld [vmem:[%s121 + $0x20] sm:$0xff]
    %v127 = vld [vmem:[%s121 + $0x28] sm:$0xff]
    %v128 = vld [vmem:[%s121 + $0x30] sm:$0xff]
    %v129 = vld [vmem:[%s121 + $0x38] sm:$0xff]
    %v130 = vsel %vm61, %v122, 0.0
    %131 = vadd.xlane.f32.xlu0 %v130
    %v132 = vpop.xlane.xlu0 %131
    %v133 = vsel %vm61, %v123, 0.0
    %134 = vadd.xlane.f32.xlu0 %v133
    %v135 = vpop.xlane.xlu0 %134
    %v136 = vsel %vm61, %v124, 0.0
    %137 = vadd.xlane.f32.xlu0 %v136
    %v138 = vpop.xlane.xlu0 %137
    %v139 = vsel %vm61, %v125, 0.0
    %140 = vadd.xlane.f32.xlu0 %v139
    %v141 = vpop.xlane.xlu0 %140
    %v142 = vsel %vm61, %v126, 0.0
    %143 = vadd.xlane.f32.xlu0 %v142
    %v144 = vpop.xlane.xlu0 %143
    %v145 = vsel %vm61, %v127, 0.0
    %146 = vadd.xlane.f32.xlu0 %v145
    %v147 = vpop.xlane.xlu0 %146
    %v148 = vsel %vm61, %v128, 0.0
    %149 = vadd.xlane.f32.xlu0 %v148
    %v150 = vpop.xlane.xlu0 %149
    %v151 = vsel %vm61, %v129, 0.0
    %152 = vadd.xlane.f32.xlu0 %v151
    %v153 = vpop.xlane.xlu0 %152
    %v162 = vadd.s32 %v95, 4294967280
    %v163 = vperm.slane %v132, %v162
    %v164 = vadd.s32 %v95, 4294967272
    %v165 = vperm.slane %v135, %v164
    %vm166 = vcmask 261312
    %v167 = vsel %vm166, %v165, %v163
    %v168 = vperm.slane %v138, %v162
    %v169 = vperm.slane %v141, %v164
    %v170 = vsel %vm166, %v169, %v168
    %v171 = vperm.slane %v144, %v162
    %v172 = vperm.slane %v147, %v164
    %v173 = vsel %vm166, %v172, %v171
    %v174 = vperm.slane %v150, %v162
    %v175 = vperm.slane %v153, %v164
    %v176 = vsel %vm166, %v175, %v174
    %v177 = vsel %vm110, %v170, %v167
    %v178 = vsel %vm112, %v173, %v177
    %v179 = vsel %vm114, %v176, %v178
    %v181 = vadd.f32 %v120, %v179
    %vm182 = vcmask 257152
    %183 = vst.msk [vmem:[#allocation2] sm:$0xf] %vm182, %v181
    %v184 = vld [vmem:[#allocation2] sm:$0xf]
    %s185 = scalar_lea.vmem [#allocation3], 128
    %v186 = vld [vmem:[%s185] sm:$0xff]
    %v187 = vld [vmem:[%s185 + $0x8] sm:$0xff]
    %v188 = vld [vmem:[%s185 + $0x10] sm:$0xff]
    %v189 = vld [vmem:[%s185 + $0x18] sm:$0xff]
    %v190 = vld [vmem:[%s185 + $0x20] sm:$0xff]
    %v191 = vld [vmem:[%s185 + $0x28] sm:$0xff]
    %v192 = vld [vmem:[%s185 + $0x30] sm:$0xff]
    %v193 = vld [vmem:[%s185 + $0x38] sm:$0xff]
    %v194 = vsel %vm61, %v186, 0.0
    %195 = vadd.xlane.f32.xlu0 %v194
    %v196 = vpop.xlane.xlu0 %195
    %v197 = vsel %vm61, %v187, 0.0
    %198 = vadd.xlane.f32.xlu0 %v197
    %v199 = vpop.xlane.xlu0 %198
    %v200 = vsel %vm61, %v188, 0.0
    %201 = vadd.xlane.f32.xlu0 %v200
    %v202 = vpop.xlane.xlu0 %201
    %v203 = vsel %vm61, %v189, 0.0
    %204 = vadd.xlane.f32.xlu0 %v203
    %v205 = vpop.xlane.xlu0 %204
    %v206 = vsel %vm61, %v190, 0.0
    %207 = vadd.xlane.f32.xlu0 %v206
    %v208 = vpop.xlane.xlu0 %207
    %v209 = vsel %vm61, %v191, 0.0
    %210 = vadd.xlane.f32.xlu0 %v209
    %v211 = vpop.xlane.xlu0 %210
    %v212 = vsel %vm61, %v192, 0.0
    %213 = vadd.xlane.f32.xlu0 %v212
    %v214 = vpop.xlane.xlu0 %213
    %v215 = vsel %vm61, %v193, 0.0
    %216 = vadd.xlane.f32.xlu0 %v215
    %v217 = vpop.xlane.xlu0 %216
    %v226 = vadd.s32 %v95, 4294967264
    %v227 = vperm.slane %v196, %v226
    %v228 = vadd.s32 %v95, 4294967256
    %v229 = vperm.slane %v199, %v228
    %vm230 = vcmask 392512
    %v231 = vsel %vm230, %v229, %v227
    %v232 = vperm.slane %v202, %v226
    %v233 = vperm.slane %v205, %v228
    %v234 = vsel %vm230, %v233, %v232
    %v235 = vperm.slane %v208, %v226
    %v236 = vperm.slane %v211, %v228
    %v237 = vsel %vm230, %v236, %v235
    %v238 = vperm.slane %v214, %v226
    %v239 = vperm.slane %v217, %v228
    %v240 = vsel %vm230, %v239, %v238
    %v241 = vsel %vm110, %v234, %v231
    %v242 = vsel %vm112, %v237, %v241
    %v243 = vsel %vm114, %v240, %v242
    %v245 = vadd.f32 %v184, %v243
    %vm246 = vcmask 388352
    %247 = vst.msk [vmem:[#allocation2] sm:$0xf] %vm246, %v245
    %v248 = vld [vmem:[#allocation2] sm:$0xf]
    %s249 = scalar_lea.vmem [#allocation3], 192
    %v250 = vld [vmem:[%s249] sm:$0xff]
    %v251 = vld [vmem:[%s249 + $0x8] sm:$0xff]
    %v252 = vld [vmem:[%s249 + $0x10] sm:$0xff]
    %v253 = vld [vmem:[%s249 + $0x18] sm:$0xff]
    %v254 = vld [vmem:[%s249 + $0x20] sm:$0xff]
    %v255 = vld [vmem:[%s249 + $0x28] sm:$0xff]
    %v256 = vld [vmem:[%s249 + $0x30] sm:$0xff]
    %v257 = vld [vmem:[%s249 + $0x38] sm:$0xff]
    %v258 = vsel %vm61, %v250, 0.0
    %259 = vadd.xlane.f32.xlu0 %v258
    %v260 = vpop.xlane.xlu0 %259
    %v261 = vsel %vm61, %v251, 0.0
    %262 = vadd.xlane.f32.xlu0 %v261
    %v263 = vpop.xlane.xlu0 %262
    %v264 = vsel %vm61, %v252, 0.0
    %265 = vadd.xlane.f32.xlu0 %v264
    %v266 = vpop.xlane.xlu0 %265
    %v267 = vsel %vm61, %v253, 0.0
    %268 = vadd.xlane.f32.xlu0 %v267
    %v269 = vpop.xlane.xlu0 %268
    %v270 = vsel %vm61, %v254, 0.0
    %271 = vadd.xlane.f32.xlu0 %v270
    %v272 = vpop.xlane.xlu0 %271
    %v273 = vsel %vm61, %v255, 0.0
    %274 = vadd.xlane.f32.xlu0 %v273
    %v275 = vpop.xlane.xlu0 %274
    %v276 = vsel %vm61, %v256, 0.0
    %277 = vadd.xlane.f32.xlu0 %v276
    %v278 = vpop.xlane.xlu0 %277
    %v279 = vsel %vm61, %v257, 0.0
    %280 = vadd.xlane.f32.xlu0 %v279
    %v281 = vpop.xlane.xlu0 %280
    %v290 = vadd.s32 %v95, 4294967248
    %v291 = vperm.slane %v260, %v290
    %v292 = vadd.s32 %v95, 4294967240
    %v293 = vperm.slane %v263, %v292
    %vm294 = vcmask 523712
    %v295 = vsel %vm294, %v293, %v291
    %v296 = vperm.slane %v266, %v290
    %v297 = vperm.slane %v269, %v292
    %v298 = vsel %vm294, %v297, %v296
    %v299 = vperm.slane %v272, %v290
    %v300 = vperm.slane %v275, %v292
    %v301 = vsel %vm294, %v300, %v299
    %v302 = vperm.slane %v278, %v290
    %v303 = vperm.slane %v281, %v292
    %v304 = vsel %vm294, %v303, %v302
    %v305 = vsel %vm110, %v298, %v295
    %v306 = vsel %vm112, %v301, %v305
    %v307 = vsel %vm114, %v304, %v306
    %v309 = vadd.f32 %v248, %v307
    %vm310 = vcmask 519552
    %311 = vst.msk [vmem:[#allocation2] sm:$0xf] %vm310, %v309
    %v312 = vld [vmem:[#allocation2] sm:$0xf]
    %s313 = scalar_lea.vmem [#allocation3], 256
    %v314 = vld [vmem:[%s313] sm:$0xff]
    %v315 = vld [vmem:[%s313 + $0x8] sm:$0xff]
    %v316 = vld [vmem:[%s313 + $0x10] sm:$0xff]
    %v317 = vld [vmem:[%s313 + $0x18] sm:$0xff]
    %v318 = vld [vmem:[%s313 + $0x20] sm:$0xff]
    %v319 = vld [vmem:[%s313 + $0x28] sm:$0xff]
    %v320 = vld [vmem:[%s313 + $0x30] sm:$0xff]
    %v321 = vld [vmem:[%s313 + $0x38] sm:$0xff]
    %v322 = vsel %vm61, %v314, 0.0
    %323 = vadd.xlane.f32.xlu0 %v322
    %v324 = vpop.xlane.xlu0 %323
    %v325 = vsel %vm61, %v315, 0.0
    %326 = vadd.xlane.f32.xlu0 %v325
    %v327 = vpop.xlane.xlu0 %326
    %v328 = vsel %vm61, %v316, 0.0
    %329 = vadd.xlane.f32.xlu0 %v328
    %v330 = vpop.xlane.xlu0 %329
    %v331 = vsel %vm61, %v317, 0.0
    %332 = vadd.xlane.f32.xlu0 %v331
    %v333 = vpop.xlane.xlu0 %332
    %v334 = vsel %vm61, %v318, 0.0
    %335 = vadd.xlane.f32.xlu0 %v334
    %v336 = vpop.xlane.xlu0 %335
    %v337 = vsel %vm61, %v319, 0.0
    %338 = vadd.xlane.f32.xlu0 %v337
    %v339 = vpop.xlane.xlu0 %338
    %v340 = vsel %vm61, %v320, 0.0
    %341 = vadd.xlane.f32.xlu0 %v340
    %v342 = vpop.xlane.xlu0 %341
    %v343 = vsel %vm61, %v321, 0.0
    %344 = vadd.xlane.f32.xlu0 %v343
    %v345 = vpop.xlane.xlu0 %344
    %v354 = vadd.s32 %v95, 4294967232
    %v355 = vperm.slane %v324, %v354
    %v356 = vadd.s32 %v95, 4294967224
    %v357 = vperm.slane %v327, %v356
    %vm358 = vcmask 654912
    %v359 = vsel %vm358, %v357, %v355
    %v360 = vperm.slane %v330, %v354
    %v361 = vperm.slane %v333, %v356
    %v362 = vsel %vm358, %v361, %v360
    %v363 = vperm.slane %v336, %v354
    %v364 = vperm.slane %v339, %v356
    %v365 = vsel %vm358, %v364, %v363
    %v366 = vperm.slane %v342, %v354
    %v367 = vperm.slane %v345, %v356
    %v368 = vsel %vm358, %v367, %v366
    %v369 = vsel %vm110, %v362, %v359
    %v370 = vsel %vm112, %v365, %v369
    %v371 = vsel %vm114, %v368, %v370
    %v373 = vadd.f32 %v312, %v371
    %vm374 = vcmask 650752
    %375 = vst.msk [vmem:[#allocation2] sm:$0xf] %vm374, %v373
    %v376 = vld [vmem:[#allocation2] sm:$0xf]
    %s377 = scalar_lea.vmem [#allocation3], 320
    %v378 = vld [vmem:[%s377] sm:$0xff]
    %v379 = vld [vmem:[%s377 + $0x8] sm:$0xff]
    %v380 = vld [vmem:[%s377 + $0x10] sm:$0xff]
    %v381 = vld [vmem:[%s377 + $0x18] sm:$0xff]
    %v382 = vld [vmem:[%s377 + $0x20] sm:$0xff]
    %v383 = vld [vmem:[%s377 + $0x28] sm:$0xff]
    %v384 = vld [vmem:[%s377 + $0x30] sm:$0xff]
    %v385 = vld [vmem:[%s377 + $0x38] sm:$0xff]
    %v386 = vsel %vm61, %v378, 0.0
    %387 = vadd.xlane.f32.xlu0 %v386
    %v388 = vpop.xlane.xlu0 %387
    %v389 = vsel %vm61, %v379, 0.0
    %390 = vadd.xlane.f32.xlu0 %v389
    %v391 = vpop.xlane.xlu0 %390
    %v392 = vsel %vm61, %v380, 0.0
    %393 = vadd.xlane.f32.xlu0 %v392
    %v394 = vpop.xlane.xlu0 %393
    %v395 = vsel %vm61, %v381, 0.0
    %396 = vadd.xlane.f32.xlu0 %v395
    %v397 = vpop.xlane.xlu0 %396
    %v398 = vsel %vm61, %v382, 0.0
    %399 = vadd.xlane.f32.xlu0 %v398
    %v400 = vpop.xlane.xlu0 %399
    %v401 = vsel %vm61, %v383, 0.0
    %402 = vadd.xlane.f32.xlu0 %v401
    %v403 = vpop.xlane.xlu0 %402
    %v404 = vsel %vm61, %v384, 0.0
    %405 = vadd.xlane.f32.xlu0 %v404
    %v406 = vpop.xlane.xlu0 %405
    %v407 = vsel %vm61, %v385, 0.0
    %408 = vadd.xlane.f32.xlu0 %v407
    %v409 = vpop.xlane.xlu0 %408
    %v418 = vadd.s32 %v95, 4294967216
    %v419 = vperm.slane %v388, %v418
    %v420 = vadd.s32 %v95, 4294967208
    %v421 = vperm.slane %v391, %v420
    %vm422 = vcmask 786112
    %v423 = vsel %vm422, %v421, %v419
    %v424 = vperm.slane %v394, %v418
    %v425 = vperm.slane %v397, %v420
    %v426 = vsel %vm422, %v425, %v424
    %v427 = vperm.slane %v400, %v418
    %v428 = vperm.slane %v403, %v420
    %v429 = vsel %vm422, %v428, %v427
    %v430 = vperm.slane %v406, %v418
    %v431 = vperm.slane %v409, %v420
    %v432 = vsel %vm422, %v431, %v430
    %v433 = vsel %vm110, %v426, %v423
    %v434 = vsel %vm112, %v429, %v433
    %v435 = vsel %vm114, %v432, %v434
    %v437 = vadd.f32 %v376, %v435
    %vm438 = vcmask 781952
    %439 = vst.msk [vmem:[#allocation2] sm:$0xf] %vm438, %v437
    %v440 = vld [vmem:[#allocation2] sm:$0xf]
    %s441 = scalar_lea.vmem [#allocation3], 384
    %v442 = vld [vmem:[%s441] sm:$0xff]
    %v443 = vld [vmem:[%s441 + $0x8] sm:$0xff]
    %v444 = vld [vmem:[%s441 + $0x10] sm:$0xff]
    %v445 = vld [vmem:[%s441 + $0x18] sm:$0xff]
    %v446 = vld [vmem:[%s441 + $0x20] sm:$0xff]
    %v447 = vld [vmem:[%s441 + $0x28] sm:$0xff]
    %v448 = vld [vmem:[%s441 + $0x30] sm:$0xff]
    %v449 = vld [vmem:[%s441 + $0x38] sm:$0xff]
    %v450 = vsel %vm61, %v442, 0.0
    %451 = vadd.xlane.f32.xlu0 %v450
    %v452 = vpop.xlane.xlu0 %451
    %v453 = vsel %vm61, %v443, 0.0
    %454 = vadd.xlane.f32.xlu0 %v453
    %v455 = vpop.xlane.xlu0 %454
    %v456 = vsel %vm61, %v444, 0.0
    %457 = vadd.xlane.f32.xlu0 %v456
    %v458 = vpop.xlane.xlu0 %457
    %v459 = vsel %vm61, %v445, 0.0
    %460 = vadd.xlane.f32.xlu0 %v459
    %v461 = vpop.xlane.xlu0 %460
    %v462 = vsel %vm61, %v446, 0.0
    %463 = vadd.xlane.f32.xlu0 %v462
    %v464 = vpop.xlane.xlu0 %463
    %v465 = vsel %vm61, %v447, 0.0
    %466 = vadd.xlane.f32.xlu0 %v465
    %v467 = vpop.xlane.xlu0 %466
    %v468 = vsel %vm61, %v448, 0.0
    %469 = vadd.xlane.f32.xlu0 %v468
    %v470 = vpop.xlane.xlu0 %469
    %v471 = vsel %vm61, %v449, 0.0
    %472 = vadd.xlane.f32.xlu0 %v471
    %v473 = vpop.xlane.xlu0 %472
    %v482 = vadd.s32 %v95, 4294967200
    %v483 = vperm.slane %v452, %v482
    %v484 = vadd.s32 %v95, 4294967192
    %v485 = vperm.slane %v455, %v484
    %vm486 = vcmask 917312
    %v487 = vsel %vm486, %v485, %v483
    %v488 = vperm.slane %v458, %v482
    %v489 = vperm.slane %v461, %v484
    %v490 = vsel %vm486, %v489, %v488
    %v491 = vperm.slane %v464, %v482
    %v492 = vperm.slane %v467, %v484
    %v493 = vsel %vm486, %v492, %v491
    %v494 = vperm.slane %v470, %v482
    %v495 = vperm.slane %v473, %v484
    %v496 = vsel %vm486, %v495, %v494
    %v497 = vsel %vm110, %v490, %v487
    %v498 = vsel %vm112, %v493, %v497
    %v499 = vsel %vm114, %v496, %v498
    %v501 = vadd.f32 %v440, %v499
    %vm502 = vcmask 913152
    %503 = vst.msk [vmem:[#allocation2] sm:$0xf] %vm502, %v501
    %v504 = vld [vmem:[#allocation2] sm:$0xf]
    %s505 = scalar_lea.vmem [#allocation3], 448
    %v506 = vld [vmem:[%s505] sm:$0xff]
    %v507 = vld [vmem:[%s505 + $0x8] sm:$0xff]
    %v508 = vld [vmem:[%s505 + $0x10] sm:$0xff]
    %v509 = vld [vmem:[%s505 + $0x18] sm:$0xff]
    %v510 = vld [vmem:[%s505 + $0x20] sm:$0xff]
    %v511 = vld [vmem:[%s505 + $0x28] sm:$0xff]
    %v512 = vld [vmem:[%s505 + $0x30] sm:$0xff]
    %v513 = vld [vmem:[%s505 + $0x38] sm:$0xff]
    %v514 = vsel %vm61, %v506, 0.0
    %515 = vadd.xlane.f32.xlu0 %v514
    %v516 = vpop.xlane.xlu0 %515
    %v517 = vsel %vm61, %v507, 0.0
    %518 = vadd.xlane.f32.xlu0 %v517
    %v519 = vpop.xlane.xlu0 %518
    %v520 = vsel %vm61, %v508, 0.0
    %521 = vadd.xlane.f32.xlu0 %v520
    %v522 = vpop.xlane.xlu0 %521
    %v523 = vsel %vm61, %v509, 0.0
    %524 = vadd.xlane.f32.xlu0 %v523
    %v525 = vpop.xlane.xlu0 %524
    %v526 = vsel %vm61, %v510, 0.0
    %527 = vadd.xlane.f32.xlu0 %v526
    %v528 = vpop.xlane.xlu0 %527
    %v529 = vsel %vm61, %v511, 0.0
    %530 = vadd.xlane.f32.xlu0 %v529
    %v531 = vpop.xlane.xlu0 %530
    %v532 = vsel %vm61, %v512, 0.0
    %533 = vadd.xlane.f32.xlu0 %v532
    %v534 = vpop.xlane.xlu0 %533
    %v535 = vsel %vm61, %v513, 0.0
    %536 = vadd.xlane.f32.xlu0 %v535
    %v537 = vpop.xlane.xlu0 %536
    %v546 = vadd.s32 %v95, 4294967184
    %v547 = vperm.slane %v516, %v546
    %v548 = vadd.s32 %v95, 4294967176
    %v549 = vperm.slane %v519, %v548
    %vm550 = vcmask 1048512
    %v551 = vsel %vm550, %v549, %v547
    %v552 = vperm.slane %v522, %v546
    %v553 = vperm.slane %v525, %v548
    %v554 = vsel %vm550, %v553, %v552
    %v555 = vperm.slane %v528, %v546
    %v556 = vperm.slane %v531, %v548
    %v557 = vsel %vm550, %v556, %v555
    %v558 = vperm.slane %v534, %v546
    %v559 = vperm.slane %v537, %v548
    %v560 = vsel %vm550, %v559, %v558
    %v561 = vsel %vm110, %v554, %v551
    %v562 = vsel %vm112, %v557, %v561
    %v563 = vsel %vm114, %v560, %v562
    %v565 = vadd.f32 %v504, %v563
    %vm566 = vcmask 1044352
    %567 = vst.msk [vmem:[#allocation2] sm:$0xf] %vm566, %v565
    // Predicated region
    $region26: #{tpu_custom_call.1} parent=1 // pred_check
      %p568 = pneg %p47
    $region27: #{tpu_custom_call.1} parent=1 // pred_check_branch
      %570 = sbr.rel (%p568) target = $region29
    $region28: #{tpu_custom_call.1} parent=1 // pred_region
      %v571 = vld [vmem:[#allocation2] sm:$0xf]
      %v572 = vmul.f32 %v571, 0.0625
      %vm573 = vcmp.lt.s32.totalorder %v95, 0
      %v574 = vsub.s32 0, %v95
      %v575 = vsel %vm573, %v574, %v95
      %v576 = vshrl.u32 %v575, 4
      %v577 = vand.u32 %v575, 15
      %v578 = vsub.s32 0, %v577
      %v579 = vsel %vm573, %v578, %v577
      %vm580 = vcmp.ne.s32.totalorder %v579, 0
      %vm581 = vcmp.lt.s32.totalorder %v579, 0
      %vm582 = vmand %vm581, %vm580
      %v583 = vadd.s32 %v579, 16
      %v584 = vsel %vm582, %v583, %v579
      %vm585 = vcmp.ne.s32.totalorder %v584, 0
      %v586 = vsel %vm585, 1, 0
      %v587 = vcvt.s32.f32 %v586
      %vm588 = vcmp.ne.s32.totalorder %v584, 15
      %v589 = vsel %vm588, 1, 0
      %v590 = vcvt.s32.f32 %v589
      %v591 = vld [vmem:[#allocation6] sm:$0xf]
      %vm592 = vcmask 31744
      %v594 = vsel %vm592, %v591, 0
      %vm596 = vcmask 1043456
      %v598 = vsel %vm596, %v572, 0
      %600 = vmatpush.msra.mxu0 0.0
      %601 = vmatpush.msra.mxu0 0.0
      %602 = vmatpush.msra.mxu0 0.0
      %603 = vmatpush.msra.mxu0 0.0
      %604 = vmatpush.msra.mxu0 0.0
      %605 = vmatpush.msra.mxu0 0.0
      %606 = vmatpush.msra.mxu0 0.0
      %607 = vmatpush.msra.mxu0 0.0
      %608 = vmatpush.msra.mxu0 0.0
      %609 = vmatpush.msra.mxu0 0.0
      %610 = vmatpush.msra.mxu0 0.0
      %611 = vmatpush.msra.mxu0 0.0
      %612 = vmatpush.msra.mxu0 0.0
      %613 = vmatpush.msra.mxu0 0.0
      %614 = vmatpush.msra.mxu0 0.0
      %615 = vmatpush.msra.mxu0 %v598
      %616 = vmatmul.f32.gmra.mxu0 %v594
      %v617 = vpop.f32.mrf.mxu0
      %v618 = vadd.f32 0.0, %v617
      %619 = vdwg.mxu0
      %s620 = scalar_lea.vmem [#allocation6], 4
      %v621 = vld [vmem:[%s620] sm:$0xf]
      %v623 = vsel %vm592, %v621, 0
      %625 = vmatpush.msra.mxu0 0.0
      %626 = vmatpush.msra.mxu0 0.0
      %627 = vmatpush.msra.mxu0 0.0
      %628 = vmatpush.msra.mxu0 0.0
      %629 = vmatpush.msra.mxu0 0.0
      %630 = vmatpush.msra.mxu0 0.0
      %631 = vmatpush.msra.mxu0 0.0
      %632 = vmatpush.msra.mxu0 0.0
      %633 = vmatpush.msra.mxu0 0.0
      %634 = vmatpush.msra.mxu0 0.0
      %635 = vmatpush.msra.mxu0 0.0
      %636 = vmatpush.msra.mxu0 0.0
      %637 = vmatpush.msra.mxu0 0.0
      %638 = vmatpush.msra.mxu0 0.0
      %639 = vmatpush.msra.mxu0 0.0
      %640 = vmatpush.msra.mxu0 %v598
      %641 = vmatmul.f32.gmra.mxu0 %v623
      %v642 = vpop.f32.mrf.mxu0
      %v643 = vadd.f32 0.0, %v642
      %644 = vdwg.mxu0
      %s645 = scalar_lea.vmem [#allocation6], 8
      %v646 = vld [vmem:[%s645] sm:$0xf]
      %v648 = vsel %vm592, %v646, 0
      %650 = vmatpush.msra.mxu0 0.0
      %651 = vmatpush.msra.mxu0 0.0
      %652 = vmatpush.msra.mxu0 0.0
      %653 = vmatpush.msra.mxu0 0.0
      %654 = vmatpush.msra.mxu0 0.0
      %655 = vmatpush.msra.mxu0 0.0
      %656 = vmatpush.msra.mxu0 0.0
      %657 = vmatpush.msra.mxu0 0.0
      %658 = vmatpush.msra.mxu0 0.0
      %659 = vmatpush.msra.mxu0 0.0
      %660 = vmatpush.msra.mxu0 0.0
      %661 = vmatpush.msra.mxu0 0.0
      %662 = vmatpush.msra.mxu0 0.0
      %663 = vmatpush.msra.mxu0 0.0
      %664 = vmatpush.msra.mxu0 0.0
      %665 = vmatpush.msra.mxu0 %v598
      %666 = vmatmul.f32.gmra.mxu0 %v648
      %v667 = vpop.f32.mrf.mxu0
      %v668 = vadd.f32 0.0, %v667
      %669 = vdwg.mxu0
      %670 = vrot.lane.b32.xlu0 %v618, 1
      %v671 = vpop.permute.xlu0 %670
      %v672 = vmul.f32 %v671, %v587
      %v673 = vadd.f32 %v672, %v643
      %674 = vrot.lane.b32.xlu0 %v668, 127
      %v675 = vpop.permute.xlu0 %674
      %v676 = vmul.f32 %v675, %v590
      %v677 = vadd.f32 %v673, %v676
      %v678 = vld [vmem:[%s2] sm:$0xf]
      %680 = vset.pattern.permute.xlu0 0
      %681 = vperm.xlu0 %680, %v678
      %v682 = vpop.permute.xlu0 %681
      %v684 = vadd.f32 %v677, %v682
      %v685 = vmax.f32 %v684, 0.0
      %s686 = scalar_lea.vmem [#allocation6], 12
      %v687 = vld [vmem:[%s686] sm:$0xf]
      %v689 = vsel %vm592, %v687, 0
      %v692 = vsel %vm596, %v685, 0
      %694 = vmatpush.msra.mxu0 0.0
      %695 = vmatpush.msra.mxu0 0.0
      %696 = vmatpush.msra.mxu0 0.0
      %697 = vmatpush.msra.mxu0 0.0
      %698 = vmatpush.msra.mxu0 0.0
      %699 = vmatpush.msra.mxu0 0.0
      %700 = vmatpush.msra.mxu0 0.0
      %701 = vmatpush.msra.mxu0 0.0
      %702 = vmatpush.msra.mxu0 0.0
      %703 = vmatpush.msra.mxu0 0.0
      %704 = vmatpush.msra.mxu0 0.0
      %705 = vmatpush.msra.mxu0 0.0
      %706 = vmatpush.msra.mxu0 0.0
      %707 = vmatpush.msra.mxu0 0.0
      %708 = vmatpush.msra.mxu0 0.0
      %709 = vmatpush.msra.mxu0 %v692
      %710 = vmatmul.f32.gmra.mxu0 %v689
      %v711 = vpop.f32.mrf.mxu0
      %v712 = vadd.f32 0.0, %v711
      %713 = vdwg.mxu0
      %s714 = scalar_lea.vmem [#allocation6], 16
      %v715 = vld [vmem:[%s714] sm:$0xf]
      %v717 = vsel %vm592, %v715, 0
      %719 = vmatpush.msra.mxu0 0.0
      %720 = vmatpush.msra.mxu0 0.0
      %721 = vmatpush.msra.mxu0 0.0
      %722 = vmatpush.msra.mxu0 0.0
      %723 = vmatpush.msra.mxu0 0.0
      %724 = vmatpush.msra.mxu0 0.0
      %725 = vmatpush.msra.mxu0 0.0
      %726 = vmatpush.msra.mxu0 0.0
      %727 = vmatpush.msra.mxu0 0.0
      %728 = vmatpush.msra.mxu0 0.0
      %729 = vmatpush.msra.mxu0 0.0
      %730 = vmatpush.msra.mxu0 0.0
      %731 = vmatpush.msra.mxu0 0.0
      %732 = vmatpush.msra.mxu0 0.0
      %733 = vmatpush.msra.mxu0 0.0
      %734 = vmatpush.msra.mxu0 %v692
      %735 = vmatmul.f32.gmra.mxu0 %v717
      %v736 = vpop.f32.mrf.mxu0
      %v737 = vadd.f32 0.0, %v736
      %738 = vdwg.mxu0
      %s739 = scalar_lea.vmem [#allocation6], 20
      %v740 = vld [vmem:[%s739] sm:$0xf]
      %v742 = vsel %vm592, %v740, 0
      %744 = vmatpush.msra.mxu0 0.0
      %745 = vmatpush.msra.mxu0 0.0
      %746 = vmatpush.msra.mxu0 0.0
      %747 = vmatpush.msra.mxu0 0.0
      %748 = vmatpush.msra.mxu0 0.0
      %749 = vmatpush.msra.mxu0 0.0
      %750 = vmatpush.msra.mxu0 0.0
      %751 = vmatpush.msra.mxu0 0.0
      %752 = vmatpush.msra.mxu0 0.0
      %753 = vmatpush.msra.mxu0 0.0
      %754 = vmatpush.msra.mxu0 0.0
      %755 = vmatpush.msra.mxu0 0.0
      %756 = vmatpush.msra.mxu0 0.0
      %757 = vmatpush.msra.mxu0 0.0
      %758 = vmatpush.msra.mxu0 0.0
      %759 = vmatpush.msra.mxu0 %v692
      %760 = vmatmul.f32.gmra.mxu0 %v742
      %v761 = vpop.f32.mrf.mxu0
      %v762 = vadd.f32 0.0, %v761
      %763 = vdwg.mxu0
      %764 = vrot.lane.b32.xlu0 %v712, 1
      %v765 = vpop.permute.xlu0 %764
      %v766 = vmul.f32 %v765, %v587
      %v767 = vadd.f32 %v766, %v737
      %768 = vrot.lane.b32.xlu0 %v762, 127
      %v769 = vpop.permute.xlu0 %768
      %v770 = vmul.f32 %v769, %v590
      %v771 = vadd.f32 %v767, %v770
      %s772 = scalar_lea.vmem %s2, 4
      %v773 = vld [vmem:[%s772] sm:$0xf]
      %775 = vset.pattern.permute.xlu0 0
      %776 = vperm.xlu0 %775, %v773
      %v777 = vpop.permute.xlu0 %776
      %v779 = vadd.f32 %v771, %v777
      %v780 = vmax.f32 %v779, 0.0
      %v781 = vmul.f32 %v780, %v572
      %s782 = scalar_lea.vmem [#allocation6], 24
      %v783 = vld [vmem:[%s782] sm:$0xf]
      %v785 = vsel %vm592, %v783, 0
      %v788 = vsel %vm596, %v781, 0
      %790 = vmatpush.msra.mxu0 0.0
      %791 = vmatpush.msra.mxu0 0.0
      %792 = vmatpush.msra.mxu0 0.0
      %793 = vmatpush.msra.mxu0 0.0
      %794 = vmatpush.msra.mxu0 0.0
      %795 = vmatpush.msra.mxu0 0.0
      %796 = vmatpush.msra.mxu0 0.0
      %797 = vmatpush.msra.mxu0 0.0
      %798 = vmatpush.msra.mxu0 0.0
      %799 = vmatpush.msra.mxu0 0.0
      %800 = vmatpush.msra.mxu0 0.0
      %801 = vmatpush.msra.mxu0 0.0
      %802 = vmatpush.msra.mxu0 0.0
      %803 = vmatpush.msra.mxu0 0.0
      %804 = vmatpush.msra.mxu0 0.0
      %805 = vmatpush.msra.mxu0 %v788
      %806 = vmatmul.f32.gmra.mxu0 %v785
      %v807 = vpop.f32.mrf.mxu0
      %v808 = vadd.f32 0.0, %v807
      %809 = vdwg.mxu0
      %s810 = scalar_lea.vmem [#allocation6], 28
      %v811 = vld [vmem:[%s810] sm:$0xf]
      %v813 = vsel %vm592, %v811, 0
      %815 = vmatpush.msra.mxu0 0.0
      %816 = vmatpush.msra.mxu0 0.0
      %817 = vmatpush.msra.mxu0 0.0
      %818 = vmatpush.msra.mxu0 0.0
      %819 = vmatpush.msra.mxu0 0.0
      %820 = vmatpush.msra.mxu0 0.0
      %821 = vmatpush.msra.mxu0 0.0
      %822 = vmatpush.msra.mxu0 0.0
      %823 = vmatpush.msra.mxu0 0.0
      %824 = vmatpush.msra.mxu0 0.0
      %825 = vmatpush.msra.mxu0 0.0
      %826 = vmatpush.msra.mxu0 0.0
      %827 = vmatpush.msra.mxu0 0.0
      %828 = vmatpush.msra.mxu0 0.0
      %829 = vmatpush.msra.mxu0 0.0
      %830 = vmatpush.msra.mxu0 %v788
      %831 = vmatmul.f32.gmra.mxu0 %v813
      %v832 = vpop.f32.mrf.mxu0
      %v833 = vadd.f32 0.0, %v832
      %834 = vdwg.mxu0
      %s835 = scalar_lea.vmem [#allocation6], 32
      %v836 = vld [vmem:[%s835] sm:$0xf]
      %v838 = vsel %vm592, %v836, 0
      %840 = vmatpush.msra.mxu0 0.0
      %841 = vmatpush.msra.mxu0 0.0
      %842 = vmatpush.msra.mxu0 0.0
      %843 = vmatpush.msra.mxu0 0.0
      %844 = vmatpush.msra.mxu0 0.0
      %845 = vmatpush.msra.mxu0 0.0
      %846 = vmatpush.msra.mxu0 0.0
      %847 = vmatpush.msra.mxu0 0.0
      %848 = vmatpush.msra.mxu0 0.0
      %849 = vmatpush.msra.mxu0 0.0
      %850 = vmatpush.msra.mxu0 0.0
      %851 = vmatpush.msra.mxu0 0.0
      %852 = vmatpush.msra.mxu0 0.0
      %853 = vmatpush.msra.mxu0 0.0
      %854 = vmatpush.msra.mxu0 0.0
      %855 = vmatpush.msra.mxu0 %v788
      %856 = vmatmul.f32.gmra.mxu0 %v838
      %v857 = vpop.f32.mrf.mxu0
      %v858 = vadd.f32 0.0, %v857
      %859 = vdwg.mxu0
      %860 = vrot.lane.b32.xlu0 %v808, 1
      %v861 = vpop.permute.xlu0 %860
      %v862 = vmul.f32 %v861, %v587
      %v863 = vadd.f32 %v862, %v833
      %864 = vrot.lane.b32.xlu0 %v858, 127
      %v865 = vpop.permute.xlu0 %864
      %v866 = vmul.f32 %v865, %v590
      %v867 = vadd.f32 %v863, %v866
      %s868 = scalar_lea.vmem %s2, 8
      %v869 = vld [vmem:[%s868] sm:$0xf]
      %871 = vset.pattern.permute.xlu0 0
      %872 = vperm.xlu0 %871, %v869
      %v873 = vpop.permute.xlu0 %872
      %v875 = vadd.f32 %v867, %v873
      %v876 = vmax.f32 %v875, 0.0
      %s877 = scalar_lea.vmem [#allocation6], 36
      %v878 = vld [vmem:[%s877] sm:$0xf]
      %v880 = vsel %vm592, %v878, 0
      %v883 = vsel %vm596, %v876, 0
      %885 = vmatpush.msra.mxu0 0.0
      %886 = vmatpush.msra.mxu0 0.0
      %887 = vmatpush.msra.mxu0 0.0
      %888 = vmatpush.msra.mxu0 0.0
      %889 = vmatpush.msra.mxu0 0.0
      %890 = vmatpush.msra.mxu0 0.0
      %891 = vmatpush.msra.mxu0 0.0
      %892 = vmatpush.msra.mxu0 0.0
      %893 = vmatpush.msra.mxu0 0.0
      %894 = vmatpush.msra.mxu0 0.0
      %895 = vmatpush.msra.mxu0 0.0
      %896 = vmatpush.msra.mxu0 0.0
      %897 = vmatpush.msra.mxu0 0.0
      %898 = vmatpush.msra.mxu0 0.0
      %899 = vmatpush.msra.mxu0 0.0
      %900 = vmatpush.msra.mxu0 %v883
      %901 = vmatmul.f32.gmra.mxu0 %v880
      %v902 = vpop.f32.mrf.mxu0
      %v903 = vadd.f32 0.0, %v902
      %904 = vdwg.mxu0
      %s905 = scalar_lea.vmem [#allocation6], 40
      %v906 = vld [vmem:[%s905] sm:$0xf]
      %v908 = vsel %vm592, %v906, 0
      %910 = vmatpush.msra.mxu0 0.0
      %911 = vmatpush.msra.mxu0 0.0
      %912 = vmatpush.msra.mxu0 0.0
      %913 = vmatpush.msra.mxu0 0.0
      %914 = vmatpush.msra.mxu0 0.0
      %915 = vmatpush.msra.mxu0 0.0
      %916 = vmatpush.msra.mxu0 0.0
      %917 = vmatpush.msra.mxu0 0.0
      %918 = vmatpush.msra.mxu0 0.0
      %919 = vmatpush.msra.mxu0 0.0
      %920 = vmatpush.msra.mxu0 0.0
      %921 = vmatpush.msra.mxu0 0.0
      %922 = vmatpush.msra.mxu0 0.0
      %923 = vmatpush.msra.mxu0 0.0
      %924 = vmatpush.msra.mxu0 0.0
      %925 = vmatpush.msra.mxu0 %v883
      %926 = vmatmul.f32.gmra.mxu0 %v908
      %v927 = vpop.f32.mrf.mxu0
      %v928 = vadd.f32 0.0, %v927
      %929 = vdwg.mxu0
      %s930 = scalar_lea.vmem [#allocation6], 44
      %v931 = vld [vmem:[%s930] sm:$0xf]
      %v933 = vsel %vm592, %v931, 0
      %935 = vmatpush.msra.mxu0 0.0
      %936 = vmatpush.msra.mxu0 0.0
      %937 = vmatpush.msra.mxu0 0.0
      %938 = vmatpush.msra.mxu0 0.0
      %939 = vmatpush.msra.mxu0 0.0
      %940 = vmatpush.msra.mxu0 0.0
      %941 = vmatpush.msra.mxu0 0.0
      %942 = vmatpush.msra.mxu0 0.0
      %943 = vmatpush.msra.mxu0 0.0
      %944 = vmatpush.msra.mxu0 0.0
      %945 = vmatpush.msra.mxu0 0.0
      %946 = vmatpush.msra.mxu0 0.0
      %947 = vmatpush.msra.mxu0 0.0
      %948 = vmatpush.msra.mxu0 0.0
      %949 = vmatpush.msra.mxu0 0.0
      %950 = vmatpush.msra.mxu0 %v883
      %951 = vmatmul.f32.gmra.mxu0 %v933
      %v952 = vpop.f32.mrf.mxu0
      %v953 = vadd.f32 0.0, %v952
      %954 = vdwg.mxu0
      %955 = vrot.lane.b32.xlu0 %v903, 1
      %v956 = vpop.permute.xlu0 %955
      %v957 = vmul.f32 %v956, %v587
      %v958 = vadd.f32 %v957, %v928
      %959 = vrot.lane.b32.xlu0 %v953, 127
      %v960 = vpop.permute.xlu0 %959
      %v961 = vmul.f32 %v960, %v590
      %v962 = vadd.f32 %v958, %v961
      %s963 = scalar_lea.vmem %s2, 12
      %v964 = vld [vmem:[%s963] sm:$0xf]
      %966 = vset.pattern.permute.xlu0 0
      %967 = vperm.xlu0 %966, %v964
      %v968 = vpop.permute.xlu0 %967
      %v970 = vadd.f32 %v962, %v968
      %v971 = vmax.f32 %v970, 0.0
      %v972 = vmul.f32 %v971, %v781
      %s973 = scalar_lea.vmem [#allocation6], 48
      %v974 = vld [vmem:[%s973] sm:$0xf]
      %v976 = vsel %vm592, %v974, 0
      %v979 = vsel %vm596, %v972, 0
      %981 = vmatpush.msra.mxu0 0.0
      %982 = vmatpush.msra.mxu0 0.0
      %983 = vmatpush.msra.mxu0 0.0
      %984 = vmatpush.msra.mxu0 0.0
      %985 = vmatpush.msra.mxu0 0.0
      %986 = vmatpush.msra.mxu0 0.0
      %987 = vmatpush.msra.mxu0 0.0
      %988 = vmatpush.msra.mxu0 0.0
      %989 = vmatpush.msra.mxu0 0.0
      %990 = vmatpush.msra.mxu0 0.0
      %991 = vmatpush.msra.mxu0 0.0
      %992 = vmatpush.msra.mxu0 0.0
      %993 = vmatpush.msra.mxu0 0.0
      %994 = vmatpush.msra.mxu0 0.0
      %995 = vmatpush.msra.mxu0 0.0
      %996 = vmatpush.msra.mxu0 %v979
      %997 = vmatmul.f32.gmra.mxu0 %v976
      %v998 = vpop.f32.mrf.mxu0
      %v999 = vadd.f32 0.0, %v998
      %1000 = vdwg.mxu0
      %s1001 = scalar_lea.vmem [#allocation6], 52
      %v1002 = vld [vmem:[%s1001] sm:$0xf]
      %v1004 = vsel %vm592, %v1002, 0
      %1006 = vmatpush.msra.mxu0 0.0
      %1007 = vmatpush.msra.mxu0 0.0
      %1008 = vmatpush.msra.mxu0 0.0
      %1009 = vmatpush.msra.mxu0 0.0
      %1010 = vmatpush.msra.mxu0 0.0
      %1011 = vmatpush.msra.mxu0 0.0
      %1012 = vmatpush.msra.mxu0 0.0
      %1013 = vmatpush.msra.mxu0 0.0
      %1014 = vmatpush.msra.mxu0 0.0
      %1015 = vmatpush.msra.mxu0 0.0
      %1016 = vmatpush.msra.mxu0 0.0
      %1017 = vmatpush.msra.mxu0 0.0
      %1018 = vmatpush.msra.mxu0 0.0
      %1019 = vmatpush.msra.mxu0 0.0
      %1020 = vmatpush.msra.mxu0 0.0
      %1021 = vmatpush.msra.mxu0 %v979
      %1022 = vmatmul.f32.gmra.mxu0 %v1004
      %v1023 = vpop.f32.mrf.mxu0
      %v1024 = vadd.f32 0.0, %v1023
      %1025 = vdwg.mxu0
      %s1026 = scalar_lea.vmem [#allocation6], 56
      %v1027 = vld [vmem:[%s1026] sm:$0xf]
      %v1029 = vsel %vm592, %v1027, 0
      %1031 = vmatpush.msra.mxu0 0.0
      %1032 = vmatpush.msra.mxu0 0.0
      %1033 = vmatpush.msra.mxu0 0.0
      %1034 = vmatpush.msra.mxu0 0.0
      %1035 = vmatpush.msra.mxu0 0.0
      %1036 = vmatpush.msra.mxu0 0.0
      %1037 = vmatpush.msra.mxu0 0.0
      %1038 = vmatpush.msra.mxu0 0.0
      %1039 = vmatpush.msra.mxu0 0.0
      %1040 = vmatpush.msra.mxu0 0.0
      %1041 = vmatpush.msra.mxu0 0.0
      %1042 = vmatpush.msra.mxu0 0.0
      %1043 = vmatpush.msra.mxu0 0.0
      %1044 = vmatpush.msra.mxu0 0.0
      %1045 = vmatpush.msra.mxu0 0.0
      %1046 = vmatpush.msra.mxu0 %v979
      %1047 = vmatmul.f32.gmra.mxu0 %v1029
      %v1048 = vpop.f32.mrf.mxu0
      %v1049 = vadd.f32 0.0, %v1048
      %1050 = vdwg.mxu0
      %1051 = vrot.lane.b32.xlu0 %v999, 1
      %v1052 = vpop.permute.xlu0 %1051
      %v1053 = vmul.f32 %v1052, %v587
      %v1054 = vadd.f32 %v1053, %v1024
      %1055 = vrot.lane.b32.xlu0 %v1049, 127
      %v1056 = vpop.permute.xlu0 %1055
      %v1057 = vmul.f32 %v1056, %v590
      %v1058 = vadd.f32 %v1054, %v1057
      %s1059 = scalar_lea.vmem %s2, 16
      %v1060 = vld [vmem:[%s1059] sm:$0xf]
      %1062 = vset.pattern.permute.xlu0 0
      %1063 = vperm.xlu0 %1062, %v1060
      %v1064 = vpop.permute.xlu0 %1063
      %v1066 = vadd.f32 %v1058, %v1064
      %v1067 = vmax.f32 %v1066, 0.0
      %s1068 = scalar_lea.vmem [#allocation6], 60
      %v1069 = vld [vmem:[%s1068] sm:$0xf]
      %v1071 = vsel %vm592, %v1069, 0
      %v1074 = vsel %vm596, %v1067, 0
      %1076 = vmatpush.msra.mxu0 0.0
      %1077 = vmatpush.msra.mxu0 0.0
      %1078 = vmatpush.msra.mxu0 0.0
      %1079 = vmatpush.msra.mxu0 0.0
      %1080 = vmatpush.msra.mxu0 0.0
      %1081 = vmatpush.msra.mxu0 0.0
      %1082 = vmatpush.msra.mxu0 0.0
      %1083 = vmatpush.msra.mxu0 0.0
      %1084 = vmatpush.msra.mxu0 0.0
      %1085 = vmatpush.msra.mxu0 0.0
      %1086 = vmatpush.msra.mxu0 0.0
      %1087 = vmatpush.msra.mxu0 0.0
      %1088 = vmatpush.msra.mxu0 0.0
      %1089 = vmatpush.msra.mxu0 0.0
      %1090 = vmatpush.msra.mxu0 0.0
      %1091 = vmatpush.msra.mxu0 %v1074
      %1092 = vmatmul.f32.gmra.mxu0 %v1071
      %v1093 = vpop.f32.mrf.mxu0
      %v1094 = vadd.f32 0.0, %v1093
      %1095 = vdwg.mxu0
      %s1096 = scalar_lea.vmem [#allocation6], 64
      %v1097 = vld [vmem:[%s1096] sm:$0xf]
      %v1099 = vsel %vm592, %v1097, 0
      %1101 = vmatpush.msra.mxu0 0.0
      %1102 = vmatpush.msra.mxu0 0.0
      %1103 = vmatpush.msra.mxu0 0.0
      %1104 = vmatpush.msra.mxu0 0.0
      %1105 = vmatpush.msra.mxu0 0.0
      %1106 = vmatpush.msra.mxu0 0.0
      %1107 = vmatpush.msra.mxu0 0.0
      %1108 = vmatpush.msra.mxu0 0.0
      %1109 = vmatpush.msra.mxu0 0.0
      %1110 = vmatpush.msra.mxu0 0.0
      %1111 = vmatpush.msra.mxu0 0.0
      %1112 = vmatpush.msra.mxu0 0.0
      %1113 = vmatpush.msra.mxu0 0.0
      %1114 = vmatpush.msra.mxu0 0.0
      %1115 = vmatpush.msra.mxu0 0.0
      %1116 = vmatpush.msra.mxu0 %v1074
      %1117 = vmatmul.f32.gmra.mxu0 %v1099
      %v1118 = vpop.f32.mrf.mxu0
      %v1119 = vadd.f32 0.0, %v1118
      %1120 = vdwg.mxu0
      %s1121 = scalar_lea.vmem [#allocation6], 68
      %v1122 = vld [vmem:[%s1121] sm:$0xf]
      %v1124 = vsel %vm592, %v1122, 0
      %1126 = vmatpush.msra.mxu0 0.0
      %1127 = vmatpush.msra.mxu0 0.0
      %1128 = vmatpush.msra.mxu0 0.0
      %1129 = vmatpush.msra.mxu0 0.0
      %1130 = vmatpush.msra.mxu0 0.0
      %1131 = vmatpush.msra.mxu0 0.0
      %1132 = vmatpush.msra.mxu0 0.0
      %1133 = vmatpush.msra.mxu0 0.0
      %1134 = vmatpush.msra.mxu0 0.0
      %1135 = vmatpush.msra.mxu0 0.0
      %1136 = vmatpush.msra.mxu0 0.0
      %1137 = vmatpush.msra.mxu0 0.0
      %1138 = vmatpush.msra.mxu0 0.0
      %1139 = vmatpush.msra.mxu0 0.0
      %1140 = vmatpush.msra.mxu0 0.0
      %1141 = vmatpush.msra.mxu0 %v1074
      %1142 = vmatmul.f32.gmra.mxu0 %v1124
      %v1143 = vpop.f32.mrf.mxu0
      %v1144 = vadd.f32 0.0, %v1143
      %1145 = vdwg.mxu0
      %1146 = vrot.lane.b32.xlu0 %v1094, 1
      %v1147 = vpop.permute.xlu0 %1146
      %v1148 = vmul.f32 %v1147, %v587
      %v1149 = vadd.f32 %v1148, %v1119
      %1150 = vrot.lane.b32.xlu0 %v1144, 127
      %v1151 = vpop.permute.xlu0 %1150
      %v1152 = vmul.f32 %v1151, %v590
      %v1153 = vadd.f32 %v1149, %v1152
      %s1154 = scalar_lea.vmem %s2, 20
      %v1155 = vld [vmem:[%s1154] sm:$0xf]
      %1157 = vset.pattern.permute.xlu0 0
      %1158 = vperm.xlu0 %1157, %v1155
      %v1159 = vpop.permute.xlu0 %1158
      %v1161 = vadd.f32 %v1153, %v1159
      %v1162 = vmax.f32 %v1161, 0.0
      %v1163 = vmul.f32 %v1162, %v972
      %s1164 = scalar_lea.vmem [#allocation6], 72
      %v1165 = vld [vmem:[%s1164] sm:$0xf]
      %1167 = vrot.lane.b32.xlu0 %v1165, 124
      %v1168 = vpop.permute.xlu0 %1167
      %v1169 = vsel %vm592, %v1168, 0
      %1171 = vmatpush.msra.mxu0 0.0
      %1172 = vmatpush.msra.mxu0 0.0
      %1173 = vmatpush.msra.mxu0 0.0
      %1174 = vmatpush.msra.mxu0 0.0
      %1175 = vmatpush.msra.mxu0 0.0
      %1176 = vmatpush.msra.mxu0 0.0
      %1177 = vmatpush.msra.mxu0 0.0
      %1178 = vmatpush.msra.mxu0 0.0
      %1179 = vmatpush.msra.mxu0 0.0
      %1180 = vmatpush.msra.mxu0 0.0
      %1181 = vmatpush.msra.mxu0 0.0
      %1182 = vmatpush.msra.mxu0 0.0
      %1183 = vmatpush.msra.mxu0 0.0
      %1184 = vmatpush.msra.mxu0 0.0
      %1185 = vmatpush.msra.mxu0 0.0
      %1186 = vmatpush.msra.mxu0 %v979
      %1187 = vmatmul.f32.gmra.mxu0 %v1169
      %v1188 = vpop.f32.mrf.mxu0
      %v1189 = vadd.f32 0.0, %v1188
      %1190 = vdwg.mxu0
      %v1191 = vsel %vm592, %v1165, 0
      %1193 = vmatpush.msra.mxu0 0.0
      %1194 = vmatpush.msra.mxu0 0.0
      %1195 = vmatpush.msra.mxu0 0.0
      %1196 = vmatpush.msra.mxu0 0.0
      %1197 = vmatpush.msra.mxu0 0.0
      %1198 = vmatpush.msra.mxu0 0.0
      %1199 = vmatpush.msra.mxu0 0.0
      %1200 = vmatpush.msra.mxu0 0.0
      %1201 = vmatpush.msra.mxu0 0.0
      %1202 = vmatpush.msra.mxu0 0.0
      %1203 = vmatpush.msra.mxu0 0.0
      %1204 = vmatpush.msra.mxu0 0.0
      %1205 = vmatpush.msra.mxu0 0.0
      %1206 = vmatpush.msra.mxu0 0.0
      %1207 = vmatpush.msra.mxu0 0.0
      %1208 = vmatpush.msra.mxu0 %v788
      %1209 = vmatmul.f32.gmra.mxu0 %v1191
      %v1210 = vpop.f32.mrf.mxu0
      %v1211 = vadd.f32 %v1189, %v1210
      %1212 = vdwg.mxu0
      %1213 = vrot.lane.b32.xlu0 %v1165, 120
      %v1214 = vpop.permute.xlu0 %1213
      %v1215 = vsel %vm592, %v1214, 0
      %v1218 = vsel %vm596, %v1163, 0
      %1220 = vmatpush.msra.mxu0 0.0
      %1221 = vmatpush.msra.mxu0 0.0
      %1222 = vmatpush.msra.mxu0 0.0
      %1223 = vmatpush.msra.mxu0 0.0
      %1224 = vmatpush.msra.mxu0 0.0
      %1225 = vmatpush.msra.mxu0 0.0
      %1226 = vmatpush.msra.mxu0 0.0
      %1227 = vmatpush.msra.mxu0 0.0
      %1228 = vmatpush.msra.mxu0 0.0
      %1229 = vmatpush.msra.mxu0 0.0
      %1230 = vmatpush.msra.mxu0 0.0
      %1231 = vmatpush.msra.mxu0 0.0
      %1232 = vmatpush.msra.mxu0 0.0
      %1233 = vmatpush.msra.mxu0 0.0
      %1234 = vmatpush.msra.mxu0 0.0
      %1235 = vmatpush.msra.mxu0 %v1218
      %1236 = vmatmul.f32.gmra.mxu0 %v1215
      %v1237 = vpop.f32.mrf.mxu0
      %v1238 = vadd.f32 0.0, %v1237
      %1239 = vdwg.mxu0
      %v1240 = vadd.f32 %v1211, %v1238
      %s1241 = scalar_lea.vmem [#allocation6], 76
      %v1242 = vld [vmem:[%s1241] sm:$0xf]
      %1244 = vrot.lane.b32.xlu0 %v1242, 124
      %v1245 = vpop.permute.xlu0 %1244
      %v1246 = vsel %vm592, %v1245, 0
      %1248 = vmatpush.msra.mxu0 0.0
      %1249 = vmatpush.msra.mxu0 0.0
      %1250 = vmatpush.msra.mxu0 0.0
      %1251 = vmatpush.msra.mxu0 0.0
      %1252 = vmatpush.msra.mxu0 0.0
      %1253 = vmatpush.msra.mxu0 0.0
      %1254 = vmatpush.msra.mxu0 0.0
      %1255 = vmatpush.msra.mxu0 0.0
      %1256 = vmatpush.msra.mxu0 0.0
      %1257 = vmatpush.msra.mxu0 0.0
      %1258 = vmatpush.msra.mxu0 0.0
      %1259 = vmatpush.msra.mxu0 0.0
      %1260 = vmatpush.msra.mxu0 0.0
      %1261 = vmatpush.msra.mxu0 0.0
      %1262 = vmatpush.msra.mxu0 0.0
      %1263 = vmatpush.msra.mxu0 %v979
      %1264 = vmatmul.f32.gmra.mxu0 %v1246
      %v1265 = vpop.f32.mrf.mxu0
      %v1266 = vadd.f32 0.0, %v1265
      %1267 = vdwg.mxu0
      %v1268 = vsel %vm592, %v1242, 0
      %1270 = vmatpush.msra.mxu0 0.0
      %1271 = vmatpush.msra.mxu0 0.0
      %1272 = vmatpush.msra.mxu0 0.0
      %1273 = vmatpush.msra.mxu0 0.0
      %1274 = vmatpush.msra.mxu0 0.0
      %1275 = vmatpush.msra.mxu0 0.0
      %1276 = vmatpush.msra.mxu0 0.0
      %1277 = vmatpush.msra.mxu0 0.0
      %1278 = vmatpush.msra.mxu0 0.0
      %1279 = vmatpush.msra.mxu0 0.0
      %1280 = vmatpush.msra.mxu0 0.0
      %1281 = vmatpush.msra.mxu0 0.0
      %1282 = vmatpush.msra.mxu0 0.0
      %1283 = vmatpush.msra.mxu0 0.0
      %1284 = vmatpush.msra.mxu0 0.0
      %1285 = vmatpush.msra.mxu0 %v788
      %1286 = vmatmul.f32.gmra.mxu0 %v1268
      %v1287 = vpop.f32.mrf.mxu0
      %v1288 = vadd.f32 %v1266, %v1287
      %1289 = vdwg.mxu0
      %1290 = vrot.lane.b32.xlu0 %v1242, 120
      %v1291 = vpop.permute.xlu0 %1290
      %v1292 = vsel %vm592, %v1291, 0
      %1294 = vmatpush.msra.mxu0 0.0
      %1295 = vmatpush.msra.mxu0 0.0
      %1296 = vmatpush.msra.mxu0 0.0
      %1297 = vmatpush.msra.mxu0 0.0
      %1298 = vmatpush.msra.mxu0 0.0
      %1299 = vmatpush.msra.mxu0 0.0
      %1300 = vmatpush.msra.mxu0 0.0
      %1301 = vmatpush.msra.mxu0 0.0
      %1302 = vmatpush.msra.mxu0 0.0
      %1303 = vmatpush.msra.mxu0 0.0
      %1304 = vmatpush.msra.mxu0 0.0
      %1305 = vmatpush.msra.mxu0 0.0
      %1306 = vmatpush.msra.mxu0 0.0
      %1307 = vmatpush.msra.mxu0 0.0
      %1308 = vmatpush.msra.mxu0 0.0
      %1309 = vmatpush.msra.mxu0 %v1218
      %1310 = vmatmul.f32.gmra.mxu0 %v1292
      %v1311 = vpop.f32.mrf.mxu0
      %v1312 = vadd.f32 0.0, %v1311
      %1313 = vdwg.mxu0
      %v1314 = vadd.f32 %v1288, %v1312
      %s1315 = scalar_lea.vmem [#allocation6], 80
      %v1316 = vld [vmem:[%s1315] sm:$0xf]
      %1318 = vrot.lane.b32.xlu0 %v1316, 124
      %v1319 = vpop.permute.xlu0 %1318
      %v1320 = vsel %vm592, %v1319, 0
      %1322 = vmatpush.msra.mxu0 0.0
      %1323 = vmatpush.msra.mxu0 0.0
      %1324 = vmatpush.msra.mxu0 0.0
      %1325 = vmatpush.msra.mxu0 0.0
      %1326 = vmatpush.msra.mxu0 0.0
      %1327 = vmatpush.msra.mxu0 0.0
      %1328 = vmatpush.msra.mxu0 0.0
      %1329 = vmatpush.msra.mxu0 0.0
      %1330 = vmatpush.msra.mxu0 0.0
      %1331 = vmatpush.msra.mxu0 0.0
      %1332 = vmatpush.msra.mxu0 0.0
      %1333 = vmatpush.msra.mxu0 0.0
      %1334 = vmatpush.msra.mxu0 0.0
      %1335 = vmatpush.msra.mxu0 0.0
      %1336 = vmatpush.msra.mxu0 0.0
      %1337 = vmatpush.msra.mxu0 %v979
      %1338 = vmatmul.f32.gmra.mxu0 %v1320
      %v1339 = vpop.f32.mrf.mxu0
      %v1340 = vadd.f32 0.0, %v1339
      %1341 = vdwg.mxu0
      %v1342 = vsel %vm592, %v1316, 0
      %1344 = vmatpush.msra.mxu0 0.0
      %1345 = vmatpush.msra.mxu0 0.0
      %1346 = vmatpush.msra.mxu0 0.0
      %1347 = vmatpush.msra.mxu0 0.0
      %1348 = vmatpush.msra.mxu0 0.0
      %1349 = vmatpush.msra.mxu0 0.0
      %1350 = vmatpush.msra.mxu0 0.0
      %1351 = vmatpush.msra.mxu0 0.0
      %1352 = vmatpush.msra.mxu0 0.0
      %1353 = vmatpush.msra.mxu0 0.0
      %1354 = vmatpush.msra.mxu0 0.0
      %1355 = vmatpush.msra.mxu0 0.0
      %1356 = vmatpush.msra.mxu0 0.0
      %1357 = vmatpush.msra.mxu0 0.0
      %1358 = vmatpush.msra.mxu0 0.0
      %1359 = vmatpush.msra.mxu0 %v788
      %1360 = vmatmul.f32.gmra.mxu0 %v1342
      %v1361 = vpop.f32.mrf.mxu0
      %v1362 = vadd.f32 %v1340, %v1361
      %1363 = vdwg.mxu0
      %1364 = vrot.lane.b32.xlu0 %v1316, 120
      %v1365 = vpop.permute.xlu0 %1364
      %v1366 = vsel %vm592, %v1365, 0
      %1368 = vmatpush.msra.mxu0 0.0
      %1369 = vmatpush.msra.mxu0 0.0
      %1370 = vmatpush.msra.mxu0 0.0
      %1371 = vmatpush.msra.mxu0 0.0
      %1372 = vmatpush.msra.mxu0 0.0
      %1373 = vmatpush.msra.mxu0 0.0
      %1374 = vmatpush.msra.mxu0 0.0
      %1375 = vmatpush.msra.mxu0 0.0
      %1376 = vmatpush.msra.mxu0 0.0
      %1377 = vmatpush.msra.mxu0 0.0
      %1378 = vmatpush.msra.mxu0 0.0
      %1379 = vmatpush.msra.mxu0 0.0
      %1380 = vmatpush.msra.mxu0 0.0
      %1381 = vmatpush.msra.mxu0 0.0
      %1382 = vmatpush.msra.mxu0 0.0
      %1383 = vmatpush.msra.mxu0 %v1218
      %1384 = vmatmul.f32.gmra.mxu0 %v1366
      %v1385 = vpop.f32.mrf.mxu0
      %v1386 = vadd.f32 0.0, %v1385
      %1387 = vdwg.mxu0
      %v1388 = vadd.f32 %v1362, %v1386
      %1389 = vrot.lane.b32.xlu0 %v1240, 1
      %v1390 = vpop.permute.xlu0 %1389
      %v1391 = vmul.f32 %v1390, %v587
      %v1392 = vadd.f32 %v1391, %v1314
      %1393 = vrot.lane.b32.xlu0 %v1388, 127
      %v1394 = vpop.permute.xlu0 %1393
      %v1395 = vmul.f32 %v1394, %v590
      %v1396 = vadd.f32 %v1392, %v1395
      %s1397 = scalar_lea.vmem %s2, 24
      %v1398 = vld [vmem:[%s1397] sm:$0xf]
      %1400 = vset.pattern.permute.xlu0 0
      %1401 = vperm.xlu0 %1400, %v1398
      %v1402 = vpop.permute.xlu0 %1401
      %v1404 = vadd.f32 %v1396, %v1402
      %v1405 = vmax.f32 %v1404, 0.0
      %s1406 = scalar_lea.vmem [#allocation6], 84
      %v1407 = vld [vmem:[%s1406] sm:$0xf]
      %v1409 = vsel %vm592, %v1407, 0
      %v1412 = vsel %vm596, %v1405, 0
      %1414 = vmatpush.msra.mxu0 0.0
      %1415 = vmatpush.msra.mxu0 0.0
      %1416 = vmatpush.msra.mxu0 0.0
      %1417 = vmatpush.msra.mxu0 0.0
      %1418 = vmatpush.msra.mxu0 0.0
      %1419 = vmatpush.msra.mxu0 0.0
      %1420 = vmatpush.msra.mxu0 0.0
      %1421 = vmatpush.msra.mxu0 0.0
      %1422 = vmatpush.msra.mxu0 0.0
      %1423 = vmatpush.msra.mxu0 0.0
      %1424 = vmatpush.msra.mxu0 0.0
      %1425 = vmatpush.msra.mxu0 0.0
      %1426 = vmatpush.msra.mxu0 0.0
      %1427 = vmatpush.msra.mxu0 0.0
      %1428 = vmatpush.msra.mxu0 0.0
      %1429 = vmatpush.msra.mxu0 %v1412
      %1430 = vmatmul.f32.gmra.mxu0 %v1409
      %v1431 = vpop.f32.mrf.mxu0
      %v1432 = vadd.f32 0.0, %v1431
      %1433 = vdwg.mxu0
      %s1434 = scalar_lea.vmem [#allocation6], 88
      %v1435 = vld [vmem:[%s1434] sm:$0xf]
      %v1437 = vsel %vm592, %v1435, 0
      %1439 = vmatpush.msra.mxu0 0.0
      %1440 = vmatpush.msra.mxu0 0.0
      %1441 = vmatpush.msra.mxu0 0.0
      %1442 = vmatpush.msra.mxu0 0.0
      %1443 = vmatpush.msra.mxu0 0.0
      %1444 = vmatpush.msra.mxu0 0.0
      %1445 = vmatpush.msra.mxu0 0.0
      %1446 = vmatpush.msra.mxu0 0.0
      %1447 = vmatpush.msra.mxu0 0.0
      %1448 = vmatpush.msra.mxu0 0.0
      %1449 = vmatpush.msra.mxu0 0.0
      %1450 = vmatpush.msra.mxu0 0.0
      %1451 = vmatpush.msra.mxu0 0.0
      %1452 = vmatpush.msra.mxu0 0.0
      %1453 = vmatpush.msra.mxu0 0.0
      %1454 = vmatpush.msra.mxu0 %v1412
      %1455 = vmatmul.f32.gmra.mxu0 %v1437
      %v1456 = vpop.f32.mrf.mxu0
      %v1457 = vadd.f32 0.0, %v1456
      %1458 = vdwg.mxu0
      %s1459 = scalar_lea.vmem [#allocation6], 92
      %v1460 = vld [vmem:[%s1459] sm:$0xf]
      %v1462 = vsel %vm592, %v1460, 0
      %1464 = vmatpush.msra.mxu0 0.0
      %1465 = vmatpush.msra.mxu0 0.0
      %1466 = vmatpush.msra.mxu0 0.0
      %1467 = vmatpush.msra.mxu0 0.0
      %1468 = vmatpush.msra.mxu0 0.0
      %1469 = vmatpush.msra.mxu0 0.0
      %1470 = vmatpush.msra.mxu0 0.0
      %1471 = vmatpush.msra.mxu0 0.0
      %1472 = vmatpush.msra.mxu0 0.0
      %1473 = vmatpush.msra.mxu0 0.0
      %1474 = vmatpush.msra.mxu0 0.0
      %1475 = vmatpush.msra.mxu0 0.0
      %1476 = vmatpush.msra.mxu0 0.0
      %1477 = vmatpush.msra.mxu0 0.0
      %1478 = vmatpush.msra.mxu0 0.0
      %1479 = vmatpush.msra.mxu0 %v1412
      %1480 = vmatmul.f32.gmra.mxu0 %v1462
      %v1481 = vpop.f32.mrf.mxu0
      %v1482 = vadd.f32 0.0, %v1481
      %1483 = vdwg.mxu0
      %1484 = vrot.lane.b32.xlu0 %v1432, 1
      %v1485 = vpop.permute.xlu0 %1484
      %v1486 = vmul.f32 %v1485, %v587
      %v1487 = vadd.f32 %v1486, %v1457
      %1488 = vrot.lane.b32.xlu0 %v1482, 127
      %v1489 = vpop.permute.xlu0 %1488
      %v1490 = vmul.f32 %v1489, %v590
      %v1491 = vadd.f32 %v1487, %v1490
      %s1492 = scalar_lea.vmem %s2, 28
      %v1493 = vld [vmem:[%s1492] sm:$0xf]
      %1495 = vset.pattern.permute.xlu0 0
      %1496 = vperm.xlu0 %1495, %v1493
      %v1497 = vpop.permute.xlu0 %1496
      %v1499 = vadd.f32 %v1491, %v1497
      %v1500 = vmax.f32 %v1499, 0.0
      %1501 = vst [vmem:[#allocation8] sm:$0xf] %v1500
    $region29: #{tpu_custom_call.1} parent=1 // pred_fallthru
      _
    // Predicated region
    $region30: #{tpu_custom_call.1} parent=1 // pred_check
      _
    $region31: #{tpu_custom_call.1} parent=1 // pred_check_branch
      %1503 = sbr.rel (0) target = $region33
    $region32: #{tpu_custom_call.1} parent=1 // pred_region
      %1505 = vsyncadd [#allocation5], 0
      %s1507 = sshll.u32 [#allocation8], 4
      %s1508 = int_to_ptr.vmem [resolvable:$true] %s1507
      %s1509 = sshll.u32 %s3, 4
      %s1510 = int_to_ptr.hbm [resolvable:$true] %s1509
      %1512 = dma.vmem_to_hbm [thread:$0]  %s1508, 64, %s1510, [#allocation5]
    $region33: #{tpu_custom_call.1} parent=1 // pred_fallthru
      _
    // Predicated region
    $region34: #{tpu_custom_call.1} parent=1 // pred_check
      _
    $region35: #{tpu_custom_call.1} parent=1 // pred_check_branch
      %1514 = sbr.rel (0) target = $region37
    $region36: #{tpu_custom_call.1} parent=1 // pred_region
      %1516 = dma.done [#allocation5], 64
    $region37: #{tpu_custom_call.1} parent=1 // pred_fallthru
      _
    %1517 = vsyncpa [#allocation4], 1
    %1518 = vsyncpa [#allocation7], 1
    %1519 = vsyncpa [#allocation5], 1

</llo_original>
